<compile_context>
chip_gen: v7x
topology: tpu7x:2x2x1
jax: 0.10.0
libtpu: 0.0.40
codegen_flags: <defaults>
</compile_context>

<pallas_src>
import numpy as np
import jax
import jax.numpy as jnp
from jax.experimental import pallas as pl
from jax.experimental.pallas import tpu as pltpu


def _round_up(x, m):
    return (x + m - 1) // m * m


def _pick_tt(Bp, Din, HP, O, T, budget_bytes=16 << 20, tt_cap=32):
    """Timesteps per grid step, sized so the double-buffered per-timestep
    blocks (x, noise, net, ro) fit a conservative VMEM budget."""
    bytes_per_t = 2 * 4 * Bp * (Din + 2 * HP + O)   # 2x double-buffer, f32
    tt = max(1, min(tt_cap, T, budget_bytes // max(bytes_per_t, 1)))
    return int(tt)


def _make_rnn_kernel(tt):
    """Sequential recurrence kernel processing `tt` timesteps per grid step.
    Per step: pre = x_t@Wx + (bx+bh) + sigma*noise_t (fused here),
              h   = relu(pre + h@Wh),
              ro  = h@Wfc + bfc (fused readout)."""

    def rnn_kernel(x_ref,      # (tt, Bp, Din)
                   noise_ref,  # (tt, Bp, HP)   already scaled by sigma
                   h0_ref,     # (Bp, HP)
                   wx_ref,     # (Din, HP)
                   wh_ref,     # (HP, HP)       f32 or bf16
                   wfc_ref,    # (HP, O)
                   bxh_ref,    # (1, HP)        bx + bh
                   bfc_ref,    # (1, O)
                   net_ref,    # out (tt, Bp, HP)
                   ro_ref,     # out (tt, Bp, O)
                   h_scratch): # VMEM (Bp, HP) f32, carried across grid steps
        tb = pl.program_id(0)

        @pl.when(tb == 0)
        def _():
            h_scratch[...] = h0_ref[...]

        wx = wx_ref[...]
        wh = wh_ref[...]
        wfc = wfc_ref[...]
        bxh = bxh_ref[...]
        bfc = bfc_ref[...]

        h = h_scratch[...]
        # tt is a small static Python int -> fully unrolled straight-line code.
        # TODO(synk): drive the MXU weight-stationary across these steps.
        for i in range(tt):
            pre = (jnp.dot(x_ref[i], wx, preferred_element_type=jnp.float32)
                   + bxh + noise_ref[i])
            h = jnp.maximum(
                pre + jnp.dot(h.astype(wh.dtype), wh,
                              preferred_element_type=jnp.float32),
                0.0)
            net_ref[i] = h
            ro_ref[i] = (jnp.dot(h, wfc, preferred_element_type=jnp.float32)
                         + bfc)

        h_scratch[...] = h

    return rnn_kernel


def recurrent_noisy_forward(x, sigma_noise, params, noise, h0, *,
                            recurrent_dtype=jnp.float32):
    """x: (B, T, Din) f32, noise: (T, B, H) f32, h0: (B, H) f32.
    Returns (out, hidden, net_units, read_out_units) with PyTorch layouts."""
    B, T, Din = x.shape
    wx, bx, wh, bh, wfc, bfc = params
    H = wh.shape[0]
    O = wfc.shape[1]

    HP = _round_up(H, 128)        # lane-dense hidden dim
    Bp = _round_up(B, 8)          # sublane-dense batch (f32 tile = 8 rows)
    pad_h = HP - H
    pad_b = Bp - B

    # Time-major inside the kernel; noise pre-scaled by sigma.
    x_tm = jnp.transpose(x, (1, 0, 2))                      # (T, B, Din)
    noise_s = jnp.float32(sigma_noise) * noise               # (T, B, H)

    tt = _pick_tt(Bp, Din, HP, O, T)
    T_pad = _round_up(T, tt)                                 # pad T, slice later

    # Zero-padding: padded hidden lanes stay exactly zero through the
    # recurrence (zero pre, zero Wh rows/cols, relu(0)=0); padded batch rows
    # and padded timesteps are independent garbage that gets sliced off.
    x_p = jnp.pad(x_tm, ((0, T_pad - T), (0, pad_b), (0, 0)))
    n_p = jnp.pad(noise_s, ((0, T_pad - T), (0, pad_b), (0, pad_h)))
    h0_p = jnp.pad(h0, ((0, pad_b), (0, pad_h)))
    wx_p = jnp.pad(wx, ((0, 0), (0, pad_h)))
    wh_p = jnp.pad(wh, ((0, pad_h), (0, pad_h))).astype(recurrent_dtype)
    wfc_p = jnp.pad(wfc, ((0, pad_h), (0, 0)))
    bxh_p = jnp.pad(bx + bh, ((0, 0), (0, pad_h)))           # (1, HP)

    n_tb = T_pad // tt

    def _const(tb):
        return (0, 0)

    grid_spec = pltpu.PrefetchScalarGridSpec(
        num_scalar_prefetch=0,
        grid=(n_tb,),
        in_specs=[
            pl.BlockSpec((tt, Bp, Din), lambda tb: (tb, 0, 0)),   # x
            pl.BlockSpec((tt, Bp, HP), lambda tb: (tb, 0, 0)),    # noise
            # Constant-index blocks: single-buffered (no wasted double-buffer).
            pl.BlockSpec((Bp, HP), _const, pipeline_mode=pl.Buffered(1)),   # h0
            pl.BlockSpec((Din, HP), _const, pipeline_mode=pl.Buffered(1)),  # wx
            pl.BlockSpec((HP, HP), _const, pipeline_mode=pl.Buffered(1)),   # wh
            pl.BlockSpec((HP, O), _const, pipeline_mode=pl.Buffered(1)),    # wfc
            pl.BlockSpec((1, HP), _const, pipeline_mode=pl.Buffered(1)),    # bx+bh
            pl.BlockSpec((1, O), _const, pipeline_mode=pl.Buffered(1)),     # bfc
        ],
        out_specs=[
            pl.BlockSpec((tt, Bp, HP), lambda tb: (tb, 0, 0)),    # net
            pl.BlockSpec((tt, Bp, O), lambda tb: (tb, 0, 0)),     # readout
        ],
        scratch_shapes=[pltpu.VMEM((Bp, HP), jnp.float32)],
    )

    # VMEM footprint estimate -> scoped limit with headroom.
    est = (2 * 4 * tt * Bp * (Din + 2 * HP + O)                  # pipelined blocks
           + 4 * (Bp * HP + Din * HP + HP * O + HP + O)          # f32 constants
           + jnp.dtype(recurrent_dtype).itemsize * HP * HP       # Wh
           + 4 * Bp * HP)                                        # scratch
    vmem_limit = int(min(56 << 20, max(16 << 20, est + (4 << 20))))

    net_tm_p, ro_tm_p = pl.pallas_call(
        _make_rnn_kernel(tt),
        grid_spec=grid_spec,
        out_shape=(jax.ShapeDtypeStruct((T_pad, Bp, HP), jnp.float32),
                   jax.ShapeDtypeStruct((T_pad, Bp, O), jnp.float32)),
        compiler_params=pltpu.CompilerParams(
            dimension_semantics=("arbitrary",),      # true sequential recurrence
            vmem_limit_bytes=vmem_limit),
    )(x_p, n_p, h0_p, wx_p, wh_p, wfc_p, bxh_p, bfc)

    net_tm = net_tm_p[:T, :B, :H]                               # drop padding
    ro_tm = ro_tm_p[:T, :B, :]

    # Present PyTorch's batch-major layout.  (Known remaining HBM round-trip;
    # see TODOs above for writing batch-major directly from the kernel.)
    net_units = jnp.transpose(net_tm, (1, 0, 2))                # (B, T, H)
    read_out_units = jnp.transpose(ro_tm, (1, 0, 2))            # (B, T, O)
    out = read_out_units[:, -1]                                 # fc(net[:, -1])
    hidden = net_units[:, -1]                                   # final h (detached)
    return out, hidden, net_units, read_out_units


def _reference(x, sigma_noise, params, noise, h0):
    """Pure-JAX reference of the same forward (same noise draws)."""
    wx, bx, wh, bh, wfc, bfc = params

    def step(h, inp):
        x_t, n_t = inp
        h_new = jax.nn.relu(x_t @ wx + bx + h @ wh + bh + sigma_noise * n_t)
        return h_new, h_new

    x_tm = jnp.transpose(x, (1, 0, 2))
    hT, net_tm = jax.lax.scan(step, h0, (x_tm, noise))
    net_units = jnp.transpose(net_tm, (1, 0, 2))
    read_out = net_units @ wfc + bfc
    return read_out[:, -1], hT, net_units, read_out


def init_params(key, input_size, hidden_dim, output_size):
    """Deterministic Linear-style init (uniform +-1/sqrt(fan_in)), weights
    stored pre-transposed so the forward computes x @ W + b."""
    ks = jax.random.split(key, 6)

    def lin(kw, kb, fan_in, fan_out):
        bound = 1.0 / np.sqrt(fan_in)
        w = jax.random.uniform(kw, (fan_in, fan_out), jnp.float32, -bound, bound)
        b = jax.random.uniform(kb, (1, fan_out), jnp.float32, -bound, bound)
        return w, b

    wx, bx = lin(ks[0], ks[1], input_size, hidden_dim)
    wh, bh = lin(ks[2], ks[3], hidden_dim, hidden_dim)
    wfc, bfc = lin(ks[4], ks[5], hidden_dim, output_size)
    return (wx, bx, wh, bh, wfc, bfc)


if __name__ == "__main__":
    # Small shapes consistent with the module's forward.
    B, T = 2, 8
    input_size, hidden_dim, output_size = 16, 32, 8
    sigma_noise = 0.1

    key = jax.random.PRNGKey(0)
    k_x, k_p, k_n, k_h = jax.random.split(key, 4)

    x = jax.random.normal(k_x, (B, T, input_size), jnp.float32)
    params = init_params(k_p, input_size, hidden_dim, output_size)
    # Noise drawn once (time-major) and fed to the kernel so the run is
    # deterministic; matches sigma_noise * torch.randn(B, H) per step.
    noise = jax.random.normal(k_n, (T, B, hidden_dim), jnp.float32)
    # hidden is None in the reference -> randn(B, H)
    h0 = jax.random.normal(k_h, (B, hidden_dim), jnp.float32)

    # ---- f32 recurrence path: strict check against the pure-JAX reference --
    out, hidden, net_units, read_out_units = jax.block_until_ready(
        recurrent_noisy_forward(x, sigma_noise, params, noise, h0))

    r_out, r_hidden, r_net, r_ro = _reference(x, sigma_noise, params, noise, h0)
    np.testing.assert_allclose(np.asarray(out), np.asarray(r_out), rtol=5e-5, atol=5e-5)
    np.testing.assert_allclose(np.asarray(hidden), np.asarray(r_hidden), rtol=5e-5, atol=5e-5)
    np.testing.assert_allclose(np.asarray(net_units), np.asarray(r_net), rtol=5e-5, atol=5e-5)
    np.testing.assert_allclose(np.asarray(read_out_units), np.asarray(r_ro), rtol=5e-5, atol=5e-5)

    # ---- bf16 recurrence path (native MXU dtype): loose tolerance ----------
    out_bf, hid_bf, net_bf, ro_bf = jax.block_until_ready(
        recurrent_noisy_forward(x, sigma_noise, params, noise, h0,
                                recurrent_dtype=jnp.bfloat16))
    np.testing.assert_allclose(np.asarray(out_bf), np.asarray(r_out), rtol=5e-2, atol=5e-2)
    np.testing.assert_allclose(np.asarray(net_bf), np.asarray(r_net), rtol=5e-2, atol=5e-2)

    assert out.shape == (B, output_size)
    assert hidden.shape == (B, hidden_dim)
    assert net_units.shape == (B, T, hidden_dim)
    assert read_out_units.shape == (B, T, output_size)

    print("KERNEL_OK")
</pallas_src>

<mosaic_0001>
module attributes {stable_mosaic.version = 11 : i64} {
  func.func @rnn_kernel(%arg0: i32, %arg1: memref<8x8x16xf32, #tpu.memory_space<vmem>>, %arg2: memref<8x8x128xf32, #tpu.memory_space<vmem>>, %arg3: memref<8x128xf32, #tpu.memory_space<vmem>>, %arg4: memref<16x128xf32, #tpu.memory_space<vmem>>, %arg5: memref<128x128xf32, #tpu.memory_space<vmem>>, %arg6: memref<128x8xf32, #tpu.memory_space<vmem>>, %arg7: memref<1x128xf32, #tpu.memory_space<vmem>>, %arg8: memref<1x8xf32, #tpu.memory_space<vmem>>, %arg9: memref<8x8x128xf32, #tpu.memory_space<vmem>>, %arg10: memref<8x8x8xf32, #tpu.memory_space<vmem>>, %arg11: memref<8x128xf32, #tpu.memory_space<vmem>>) attributes {dimension_semantics = [#tpu.dimension_semantics<arbitrary>], iteration_bounds = array<i64: 1>, scalar_prefetch = 0 : i64, scratch_operands = 1 : i64, tpu.core_type = #tpu.core_type<tc>, window_params = [{transform_indices = @transform_0, window_bounds = array<i64: 8, 8, 16>}, {transform_indices = @transform_1, window_bounds = array<i64: 8, 8, 128>}, {pipeline_mode = #tpu.pipeline_mode<synchronous>, transform_indices = @transform_2, window_bounds = array<i64: 8, 128>}, {pipeline_mode = #tpu.pipeline_mode<synchronous>, transform_indices = @transform_3, window_bounds = array<i64: 16, 128>}, {pipeline_mode = #tpu.pipeline_mode<synchronous>, transform_indices = @transform_4, window_bounds = array<i64: 128, 128>}, {pipeline_mode = #tpu.pipeline_mode<synchronous>, transform_indices = @transform_5, window_bounds = array<i64: 128, 8>}, {pipeline_mode = #tpu.pipeline_mode<synchronous>, transform_indices = @transform_6, window_bounds = array<i64: 1, 128>}, {pipeline_mode = #tpu.pipeline_mode<synchronous>, transform_indices = @transform_7, window_bounds = array<i64: 1, 8>}, {transform_indices = @transform_8, window_bounds = array<i64: 8, 8, 128>}, {transform_indices = @transform_9, window_bounds = array<i64: 8, 8, 8>}]} {
    %c0_i32 = arith.constant 0 : i32
    %0 = arith.cmpi eq, %arg0, %c0_i32 : i32
    %1 = arith.extui %0 : i1 to i32
    %c0_i32_0 = arith.constant 0 : i32
    %2 = arith.cmpi ne, %1, %c0_i32_0 : i32
    scf.if %2 {
      %c0_134 = arith.constant 0 : index
      %c0_135 = arith.constant 0 : index
      %178 = vector.load %arg3[%c0_134, %c0_135] : memref<8x128xf32, #tpu.memory_space<vmem>>, vector<8x128xf32>
      %c0_136 = arith.constant 0 : index
      %c0_137 = arith.constant 0 : index
      %179 = vector.load %arg11[%c0_136, %c0_137] : memref<8x128xf32, #tpu.memory_space<vmem>>, vector<8x128xf32>
      tpu.vector_store %arg11[%c0_136, %c0_137], %178 {strides = array<i32>} : memref<8x128xf32, #tpu.memory_space<vmem>>, vector<8x128xf32>,
    } else {
    }
    %c0 = arith.constant 0 : index
    %c0_1 = arith.constant 0 : index
    %3 = vector.load %arg4[%c0, %c0_1] : memref<16x128xf32, #tpu.memory_space<vmem>>, vector<16x128xf32>
    %c0_2 = arith.constant 0 : index
    %c0_3 = arith.constant 0 : index
    %4 = vector.load %arg5[%c0_2, %c0_3] : memref<128x128xf32, #tpu.memory_space<vmem>>, vector<128x128xf32>
    %c0_4 = arith.constant 0 : index
    %c0_5 = arith.constant 0 : index
    %5 = vector.load %arg6[%c0_4, %c0_5] : memref<128x8xf32, #tpu.memory_space<vmem>>, vector<128x8xf32>
    %c0_6 = arith.constant 0 : index
    %c0_7 = arith.constant 0 : index
    %6 = vector.load %arg7[%c0_6, %c0_7] : memref<1x128xf32, #tpu.memory_space<vmem>>, vector<1x128xf32>
    %c0_8 = arith.constant 0 : index
    %c0_9 = arith.constant 0 : index
    %7 = vector.load %arg8[%c0_8, %c0_9] : memref<1x8xf32, #tpu.memory_space<vmem>>, vector<1x8xf32>
    %c0_10 = arith.constant 0 : index
    %c0_11 = arith.constant 0 : index
    %8 = vector.load %arg11[%c0_10, %c0_11] : memref<8x128xf32, #tpu.memory_space<vmem>>, vector<8x128xf32>
    %c0_12 = arith.constant 0 : index
    %c0_13 = arith.constant 0 : index
    %c0_14 = arith.constant 0 : index
    %9 = vector.load %arg1[%c0_12, %c0_13, %c0_14] : memref<8x8x16xf32, #tpu.memory_space<vmem>>, vector<1x8x16xf32>
    %10 = vector.shape_cast %9 : vector<1x8x16xf32> to vector<8x16xf32>
    %cst = arith.constant dense<0.000000e+00> : vector<8x128xf32>
    %11 = tpu.matmul %10, %3, %cst {dimension_numbers = #tpu.dot_dimension_numbers<[1], [0], [0], [1], [0, 0, 1, 1], [], []>} : vector<8x16xf32>, vector<16x128xf32>, vector<8x128xf32> -> vector<8x128xf32>
    %12 = vector.broadcast %6 : vector<1x128xf32> to vector<8x128xf32>
    %13 = arith.addf %11, %12 : vector<8x128xf32>
    %c0_15 = arith.constant 0 : index
    %c0_16 = arith.constant 0 : index
    %c0_17 = arith.constant 0 : index
    %14 = vector.load %arg2[%c0_15, %c0_16, %c0_17] : memref<8x8x128xf32, #tpu.memory_space<vmem>>, vector<1x8x128xf32>
    %15 = vector.shape_cast %14 : vector<1x8x128xf32> to vector<8x128xf32>
    %16 = arith.addf %13, %15 : vector<8x128xf32>
    %cst_18 = arith.constant dense<0.000000e+00> : vector<8x128xf32>
    %17 = tpu.matmul %8, %4, %cst_18 {dimension_numbers = #tpu.dot_dimension_numbers<[1], [0], [0], [1], [0, 0, 1, 1], [], []>} : vector<8x128xf32>, vector<128x128xf32>, vector<8x128xf32> -> vector<8x128xf32>
    %18 = arith.addf %16, %17 : vector<8x128xf32>
    %cst_19 = arith.constant 0.000000e+00 : f32
    %19 = vector.broadcast %cst_19 : f32 to vector<8x128xf32>
    %20 = arith.maximumf %18, %19 : vector<8x128xf32>
    %c0_20 = arith.constant 0 : index
    %c0_21 = arith.constant 0 : index
    %c0_22 = arith.constant 0 : index
    %21 = vector.load %arg9[%c0_20, %c0_21, %c0_22] : memref<8x8x128xf32, #tpu.memory_space<vmem>>, vector<1x8x128xf32>
    %22 = vector.shape_cast %21 : vector<1x8x128xf32> to vector<8x128xf32>
    %23 = vector.shape_cast %20 : vector<8x128xf32> to vector<1x8x128xf32>
    tpu.vector_store %arg9[%c0_20, %c0_21, %c0_22], %23 {strides = array<i32>} : memref<8x8x128xf32, #tpu.memory_space<vmem>>, vector<1x8x128xf32>,
    %cst_23 = arith.constant dense<0.000000e+00> : vector<8x8xf32>
    %24 = tpu.matmul %20, %5, %cst_23 {dimension_numbers = #tpu.dot_dimension_numbers<[1], [0], [0], [1], [0, 0, 1, 1], [], []>} : vector<8x128xf32>, vector<128x8xf32>, vector<8x8xf32> -> vector<8x8xf32>
    %25 = vector.broadcast %7 : vector<1x8xf32> to vector<8x8xf32>
    %26 = arith.addf %24, %25 : vector<8x8xf32>
    %c0_24 = arith.constant 0 : index
    %c0_25 = arith.constant 0 : index
    %c0_26 = arith.constant 0 : index
    %27 = vector.load %arg10[%c0_24, %c0_25, %c0_26] : memref<8x8x8xf32, #tpu.memory_space<vmem>>, vector<1x8x8xf32>
    %28 = vector.shape_cast %27 : vector<1x8x8xf32> to vector<8x8xf32>
    %29 = vector.shape_cast %26 : vector<8x8xf32> to vector<1x8x8xf32>
    tpu.vector_store %arg10[%c0_24, %c0_25, %c0_26], %29 {strides = array<i32>} : memref<8x8x8xf32, #tpu.memory_space<vmem>>, vector<1x8x8xf32>,
    %c1 = arith.constant 1 : index
    %c0_27 = arith.constant 0 : index
    %c0_28 = arith.constant 0 : index
    %30 = vector.load %arg1[%c1, %c0_27, %c0_28] : memref<8x8x16xf32, #tpu.memory_space<vmem>>, vector<1x8x16xf32>
    %31 = vector.shape_cast %30 : vector<1x8x16xf32> to vector<8x16xf32>
    %cst_29 = arith.constant dense<0.000000e+00> : vector<8x128xf32>
    %32 = tpu.matmul %31, %3, %cst_29 {dimension_numbers = #tpu.dot_dimension_numbers<[1], [0], [0], [1], [0, 0, 1, 1], [], []>} : vector<8x16xf32>, vector<16x128xf32>, vector<8x128xf32> -> vector<8x128xf32>
    %33 = vector.broadcast %6 : vector<1x128xf32> to vector<8x128xf32>
    %34 = arith.addf %32, %33 : vector<8x128xf32>
    %c1_30 = arith.constant 1 : index
    %c0_31 = arith.constant 0 : index
    %c0_32 = arith.constant 0 : index
    %35 = vector.load %arg2[%c1_30, %c0_31, %c0_32] : memref<8x8x128xf32, #tpu.memory_space<vmem>>, vector<1x8x128xf32>
    %36 = vector.shape_cast %35 : vector<1x8x128xf32> to vector<8x128xf32>
    %37 = arith.addf %34, %36 : vector<8x128xf32>
    %cst_33 = arith.constant dense<0.000000e+00> : vector<8x128xf32>
    %38 = tpu.matmul %20, %4, %cst_33 {dimension_numbers = #tpu.dot_dimension_numbers<[1], [0], [0], [1], [0, 0, 1, 1], [], []>} : vector<8x128xf32>, vector<128x128xf32>, vector<8x128xf32> -> vector<8x128xf32>
    %39 = arith.addf %37, %38 : vector<8x128xf32>
    %cst_34 = arith.constant 0.000000e+00 : f32
    %40 = vector.broadcast %cst_34 : f32 to vector<8x128xf32>
    %41 = arith.maximumf %39, %40 : vector<8x128xf32>
    %c1_35 = arith.constant 1 : index
    %c0_36 = arith.constant 0 : index
    %c0_37 = arith.constant 0 : index
    %42 = vector.load %arg9[%c1_35, %c0_36, %c0_37] : memref<8x8x128xf32, #tpu.memory_space<vmem>>, vector<1x8x128xf32>
    %43 = vector.shape_cast %42 : vector<1x8x128xf32> to vector<8x128xf32>
    %44 = vector.shape_cast %41 : vector<8x128xf32> to vector<1x8x128xf32>
    tpu.vector_store %arg9[%c1_35, %c0_36, %c0_37], %44 {strides = array<i32>} : memref<8x8x128xf32, #tpu.memory_space<vmem>>, vector<1x8x128xf32>,
    %cst_38 = arith.constant dense<0.000000e+00> : vector<8x8xf32>
    %45 = tpu.matmul %41, %5, %cst_38 {dimension_numbers = #tpu.dot_dimension_numbers<[1], [0], [0], [1], [0, 0, 1, 1], [], []>} : vector<8x128xf32>, vector<128x8xf32>, vector<8x8xf32> -> vector<8x8xf32>
    %46 = vector.broadcast %7 : vector<1x8xf32> to vector<8x8xf32>
    %47 = arith.addf %45, %46 : vector<8x8xf32>
    %c1_39 = arith.constant 1 : index
    %c0_40 = arith.constant 0 : index
    %c0_41 = arith.constant 0 : index
    %48 = vector.load %arg10[%c1_39, %c0_40, %c0_41] : memref<8x8x8xf32, #tpu.memory_space<vmem>>, vector<1x8x8xf32>
    %49 = vector.shape_cast %48 : vector<1x8x8xf32> to vector<8x8xf32>
    %50 = vector.shape_cast %47 : vector<8x8xf32> to vector<1x8x8xf32>
    tpu.vector_store %arg10[%c1_39, %c0_40, %c0_41], %50 {strides = array<i32>} : memref<8x8x8xf32, #tpu.memory_space<vmem>>, vector<1x8x8xf32>,
    %c2 = arith.constant 2 : index
    %c0_42 = arith.constant 0 : index
    %c0_43 = arith.constant 0 : index
    %51 = vector.load %arg1[%c2, %c0_42, %c0_43] : memref<8x8x16xf32, #tpu.memory_space<vmem>>, vector<1x8x16xf32>
    %52 = vector.shape_cast %51 : vector<1x8x16xf32> to vector<8x16xf32>
    %cst_44 = arith.constant dense<0.000000e+00> : vector<8x128xf32>
    %53 = tpu.matmul %52, %3, %cst_44 {dimension_numbers = #tpu.dot_dimension_numbers<[1], [0], [0], [1], [0, 0, 1, 1], [], []>} : vector<8x16xf32>, vector<16x128xf32>, vector<8x128xf32> -> vector<8x128xf32>
    %54 = vector.broadcast %6 : vector<1x128xf32> to vector<8x128xf32>
    %55 = arith.addf %53, %54 : vector<8x128xf32>
    %c2_45 = arith.constant 2 : index
    %c0_46 = arith.constant 0 : index
    %c0_47 = arith.constant 0 : index
    %56 = vector.load %arg2[%c2_45, %c0_46, %c0_47] : memref<8x8x128xf32, #tpu.memory_space<vmem>>, vector<1x8x128xf32>
    %57 = vector.shape_cast %56 : vector<1x8x128xf32> to vector<8x128xf32>
    %58 = arith.addf %55, %57 : vector<8x128xf32>
    %cst_48 = arith.constant dense<0.000000e+00> : vector<8x128xf32>
    %59 = tpu.matmul %41, %4, %cst_48 {dimension_numbers = #tpu.dot_dimension_numbers<[1], [0], [0], [1], [0, 0, 1, 1], [], []>} : vector<8x128xf32>, vector<128x128xf32>, vector<8x128xf32> -> vector<8x128xf32>
    %60 = arith.addf %58, %59 : vector<8x128xf32>
    %cst_49 = arith.constant 0.000000e+00 : f32
    %61 = vector.broadcast %cst_49 : f32 to vector<8x128xf32>
    %62 = arith.maximumf %60, %61 : vector<8x128xf32>
    %c2_50 = arith.constant 2 : index
    %c0_51 = arith.constant 0 : index
    %c0_52 = arith.constant 0 : index
    %63 = vector.load %arg9[%c2_50, %c0_51, %c0_52] : memref<8x8x128xf32, #tpu.memory_space<vmem>>, vector<1x8x128xf32>
    %64 = vector.shape_cast %63 : vector<1x8x128xf32> to vector<8x128xf32>
    %65 = vector.shape_cast %62 : vector<8x128xf32> to vector<1x8x128xf32>
    tpu.vector_store %arg9[%c2_50, %c0_51, %c0_52], %65 {strides = array<i32>} : memref<8x8x128xf32, #tpu.memory_space<vmem>>, vector<1x8x128xf32>,
    %cst_53 = arith.constant dense<0.000000e+00> : vector<8x8xf32>
    %66 = tpu.matmul %62, %5, %cst_53 {dimension_numbers = #tpu.dot_dimension_numbers<[1], [0], [0], [1], [0, 0, 1, 1], [], []>} : vector<8x128xf32>, vector<128x8xf32>, vector<8x8xf32> -> vector<8x8xf32>
    %67 = vector.broadcast %7 : vector<1x8xf32> to vector<8x8xf32>
    %68 = arith.addf %66, %67 : vector<8x8xf32>
    %c2_54 = arith.constant 2 : index
    %c0_55 = arith.constant 0 : index
    %c0_56 = arith.constant 0 : index
    %69 = vector.load %arg10[%c2_54, %c0_55, %c0_56] : memref<8x8x8xf32, #tpu.memory_space<vmem>>, vector<1x8x8xf32>
    %70 = vector.shape_cast %69 : vector<1x8x8xf32> to vector<8x8xf32>
    %71 = vector.shape_cast %68 : vector<8x8xf32> to vector<1x8x8xf32>
    tpu.vector_store %arg10[%c2_54, %c0_55, %c0_56], %71 {strides = array<i32>} : memref<8x8x8xf32, #tpu.memory_space<vmem>>, vector<1x8x8xf32>,
    %c3 = arith.constant 3 : index
    %c0_57 = arith.constant 0 : index
    %c0_58 = arith.constant 0 : index
    %72 = vector.load %arg1[%c3, %c0_57, %c0_58] : memref<8x8x16xf32, #tpu.memory_space<vmem>>, vector<1x8x16xf32>
    %73 = vector.shape_cast %72 : vector<1x8x16xf32> to vector<8x16xf32>
    %cst_59 = arith.constant dense<0.000000e+00> : vector<8x128xf32>
    %74 = tpu.matmul %73, %3, %cst_59 {dimension_numbers = #tpu.dot_dimension_numbers<[1], [0], [0], [1], [0, 0, 1, 1], [], []>} : vector<8x16xf32>, vector<16x128xf32>, vector<8x128xf32> -> vector<8x128xf32>
    %75 = vector.broadcast %6 : vector<1x128xf32> to vector<8x128xf32>
    %76 = arith.addf %74, %75 : vector<8x128xf32>
    %c3_60 = arith.constant 3 : index
    %c0_61 = arith.constant 0 : index
    %c0_62 = arith.constant 0 : index
    %77 = vector.load %arg2[%c3_60, %c0_61, %c0_62] : memref<8x8x128xf32, #tpu.memory_space<vmem>>, vector<1x8x128xf32>
    %78 = vector.shape_cast %77 : vector<1x8x128xf32> to vector<8x128xf32>
    %79 = arith.addf %76, %78 : vector<8x128xf32>
    %cst_63 = arith.constant dense<0.000000e+00> : vector<8x128xf32>
    %80 = tpu.matmul %62, %4, %cst_63 {dimension_numbers = #tpu.dot_dimension_numbers<[1], [0], [0], [1], [0, 0, 1, 1], [], []>} : vector<8x128xf32>, vector<128x128xf32>, vector<8x128xf32> -> vector<8x128xf32>
    %81 = arith.addf %79, %80 : vector<8x128xf32>
    %cst_64 = arith.constant 0.000000e+00 : f32
    %82 = vector.broadcast %cst_64 : f32 to vector<8x128xf32>
    %83 = arith.maximumf %81, %82 : vector<8x128xf32>
    %c3_65 = arith.constant 3 : index
    %c0_66 = arith.constant 0 : index
    %c0_67 = arith.constant 0 : index
    %84 = vector.load %arg9[%c3_65, %c0_66, %c0_67] : memref<8x8x128xf32, #tpu.memory_space<vmem>>, vector<1x8x128xf32>
    %85 = vector.shape_cast %84 : vector<1x8x128xf32> to vector<8x128xf32>
    %86 = vector.shape_cast %83 : vector<8x128xf32> to vector<1x8x128xf32>
    tpu.vector_store %arg9[%c3_65, %c0_66, %c0_67], %86 {strides = array<i32>} : memref<8x8x128xf32, #tpu.memory_space<vmem>>, vector<1x8x128xf32>,
    %cst_68 = arith.constant dense<0.000000e+00> : vector<8x8xf32>
    %87 = tpu.matmul %83, %5, %cst_68 {dimension_numbers = #tpu.dot_dimension_numbers<[1], [0], [0], [1], [0, 0, 1, 1], [], []>} : vector<8x128xf32>, vector<128x8xf32>, vector<8x8xf32> -> vector<8x8xf32>
    %88 = vector.broadcast %7 : vector<1x8xf32> to vector<8x8xf32>
    %89 = arith.addf %87, %88 : vector<8x8xf32>
    %c3_69 = arith.constant 3 : index
    %c0_70 = arith.constant 0 : index
    %c0_71 = arith.constant 0 : index
    %90 = vector.load %arg10[%c3_69, %c0_70, %c0_71] : memref<8x8x8xf32, #tpu.memory_space<vmem>>, vector<1x8x8xf32>
    %91 = vector.shape_cast %90 : vector<1x8x8xf32> to vector<8x8xf32>
    %92 = vector.shape_cast %89 : vector<8x8xf32> to vector<1x8x8xf32>
    tpu.vector_store %arg10[%c3_69, %c0_70, %c0_71], %92 {strides = array<i32>} : memref<8x8x8xf32, #tpu.memory_space<vmem>>, vector<1x8x8xf32>,
    %c4 = arith.constant 4 : index
    %c0_72 = arith.constant 0 : index
    %c0_73 = arith.constant 0 : index
    %93 = vector.load %arg1[%c4, %c0_72, %c0_73] : memref<8x8x16xf32, #tpu.memory_space<vmem>>, vector<1x8x16xf32>
    %94 = vector.shape_cast %93 : vector<1x8x16xf32> to vector<8x16xf32>
    %cst_74 = arith.constant dense<0.000000e+00> : vector<8x128xf32>
    %95 = tpu.matmul %94, %3, %cst_74 {dimension_numbers = #tpu.dot_dimension_numbers<[1], [0], [0], [1], [0, 0, 1, 1], [], []>} : vector<8x16xf32>, vector<16x128xf32>, vector<8x128xf32> -> vector<8x128xf32>
    %96 = vector.broadcast %6 : vector<1x128xf32> to vector<8x128xf32>
    %97 = arith.addf %95, %96 : vector<8x128xf32>
    %c4_75 = arith.constant 4 : index
    %c0_76 = arith.constant 0 : index
    %c0_77 = arith.constant 0 : index
    %98 = vector.load %arg2[%c4_75, %c0_76, %c0_77] : memref<8x8x128xf32, #tpu.memory_space<vmem>>, vector<1x8x128xf32>
    %99 = vector.shape_cast %98 : vector<1x8x128xf32> to vector<8x128xf32>
    %100 = arith.addf %97, %99 : vector<8x128xf32>
    %cst_78 = arith.constant dense<0.000000e+00> : vector<8x128xf32>
    %101 = tpu.matmul %83, %4, %cst_78 {dimension_numbers = #tpu.dot_dimension_numbers<[1], [0], [0], [1], [0, 0, 1, 1], [], []>} : vector<8x128xf32>, vector<128x128xf32>, vector<8x128xf32> -> vector<8x128xf32>
    %102 = arith.addf %100, %101 : vector<8x128xf32>
    %cst_79 = arith.constant 0.000000e+00 : f32
    %103 = vector.broadcast %cst_79 : f32 to vector<8x128xf32>
    %104 = arith.maximumf %102, %103 : vector<8x128xf32>
    %c4_80 = arith.constant 4 : index
    %c0_81 = arith.constant 0 : index
    %c0_82 = arith.constant 0 : index
    %105 = vector.load %arg9[%c4_80, %c0_81, %c0_82] : memref<8x8x128xf32, #tpu.memory_space<vmem>>, vector<1x8x128xf32>
    %106 = vector.shape_cast %105 : vector<1x8x128xf32> to vector<8x128xf32>
    %107 = vector.shape_cast %104 : vector<8x128xf32> to vector<1x8x128xf32>
    tpu.vector_store %arg9[%c4_80, %c0_81, %c0_82], %107 {strides = array<i32>} : memref<8x8x128xf32, #tpu.memory_space<vmem>>, vector<1x8x128xf32>,
    %cst_83 = arith.constant dense<0.000000e+00> : vector<8x8xf32>
    %108 = tpu.matmul %104, %5, %cst_83 {dimension_numbers = #tpu.dot_dimension_numbers<[1], [0], [0], [1], [0, 0, 1, 1], [], []>} : vector<8x128xf32>, vector<128x8xf32>, vector<8x8xf32> -> vector<8x8xf32>
    %109 = vector.broadcast %7 : vector<1x8xf32> to vector<8x8xf32>
    %110 = arith.addf %108, %109 : vector<8x8xf32>
    %c4_84 = arith.constant 4 : index
    %c0_85 = arith.constant 0 : index
    %c0_86 = arith.constant 0 : index
    %111 = vector.load %arg10[%c4_84, %c0_85, %c0_86] : memref<8x8x8xf32, #tpu.memory_space<vmem>>, vector<1x8x8xf32>
    %112 = vector.shape_cast %111 : vector<1x8x8xf32> to vector<8x8xf32>
    %113 = vector.shape_cast %110 : vector<8x8xf32> to vector<1x8x8xf32>
    tpu.vector_store %arg10[%c4_84, %c0_85, %c0_86], %113 {strides = array<i32>} : memref<8x8x8xf32, #tpu.memory_space<vmem>>, vector<1x8x8xf32>,
    %c5 = arith.constant 5 : index
    %c0_87 = arith.constant 0 : index
    %c0_88 = arith.constant 0 : index
    %114 = vector.load %arg1[%c5, %c0_87, %c0_88] : memref<8x8x16xf32, #tpu.memory_space<vmem>>, vector<1x8x16xf32>
    %115 = vector.shape_cast %114 : vector<1x8x16xf32> to vector<8x16xf32>
    %cst_89 = arith.constant dense<0.000000e+00> : vector<8x128xf32>
    %116 = tpu.matmul %115, %3, %cst_89 {dimension_numbers = #tpu.dot_dimension_numbers<[1], [0], [0], [1], [0, 0, 1, 1], [], []>} : vector<8x16xf32>, vector<16x128xf32>, vector<8x128xf32> -> vector<8x128xf32>
    %117 = vector.broadcast %6 : vector<1x128xf32> to vector<8x128xf32>
    %118 = arith.addf %116, %117 : vector<8x128xf32>
    %c5_90 = arith.constant 5 : index
    %c0_91 = arith.constant 0 : index
    %c0_92 = arith.constant 0 : index
    %119 = vector.load %arg2[%c5_90, %c0_91, %c0_92] : memref<8x8x128xf32, #tpu.memory_space<vmem>>, vector<1x8x128xf32>
    %120 = vector.shape_cast %119 : vector<1x8x128xf32> to vector<8x128xf32>
    %121 = arith.addf %118, %120 : vector<8x128xf32>
    %cst_93 = arith.constant dense<0.000000e+00> : vector<8x128xf32>
    %122 = tpu.matmul %104, %4, %cst_93 {dimension_numbers = #tpu.dot_dimension_numbers<[1], [0], [0], [1], [0, 0, 1, 1], [], []>} : vector<8x128xf32>, vector<128x128xf32>, vector<8x128xf32> -> vector<8x128xf32>
    %123 = arith.addf %121, %122 : vector<8x128xf32>
    %cst_94 = arith.constant 0.000000e+00 : f32
    %124 = vector.broadcast %cst_94 : f32 to vector<8x128xf32>
    %125 = arith.maximumf %123, %124 : vector<8x128xf32>
    %c5_95 = arith.constant 5 : index
    %c0_96 = arith.constant 0 : index
    %c0_97 = arith.constant 0 : index
    %126 = vector.load %arg9[%c5_95, %c0_96, %c0_97] : memref<8x8x128xf32, #tpu.memory_space<vmem>>, vector<1x8x128xf32>
    %127 = vector.shape_cast %126 : vector<1x8x128xf32> to vector<8x128xf32>
    %128 = vector.shape_cast %125 : vector<8x128xf32> to vector<1x8x128xf32>
    tpu.vector_store %arg9[%c5_95, %c0_96, %c0_97], %128 {strides = array<i32>} : memref<8x8x128xf32, #tpu.memory_space<vmem>>, vector<1x8x128xf32>,
    %cst_98 = arith.constant dense<0.000000e+00> : vector<8x8xf32>
    %129 = tpu.matmul %125, %5, %cst_98 {dimension_numbers = #tpu.dot_dimension_numbers<[1], [0], [0], [1], [0, 0, 1, 1], [], []>} : vector<8x128xf32>, vector<128x8xf32>, vector<8x8xf32> -> vector<8x8xf32>
    %130 = vector.broadcast %7 : vector<1x8xf32> to vector<8x8xf32>
    %131 = arith.addf %129, %130 : vector<8x8xf32>
    %c5_99 = arith.constant 5 : index
    %c0_100 = arith.constant 0 : index
    %c0_101 = arith.constant 0 : index
    %132 = vector.load %arg10[%c5_99, %c0_100, %c0_101] : memref<8x8x8xf32, #tpu.memory_space<vmem>>, vector<1x8x8xf32>
    %133 = vector.shape_cast %132 : vector<1x8x8xf32> to vector<8x8xf32>
    %134 = vector.shape_cast %131 : vector<8x8xf32> to vector<1x8x8xf32>
    tpu.vector_store %arg10[%c5_99, %c0_100, %c0_101], %134 {strides = array<i32>} : memref<8x8x8xf32, #tpu.memory_space<vmem>>, vector<1x8x8xf32>,
    %c6 = arith.constant 6 : index
    %c0_102 = arith.constant 0 : index
    %c0_103 = arith.constant 0 : index
    %135 = vector.load %arg1[%c6, %c0_102, %c0_103] : memref<8x8x16xf32, #tpu.memory_space<vmem>>, vector<1x8x16xf32>
    %136 = vector.shape_cast %135 : vector<1x8x16xf32> to vector<8x16xf32>
    %cst_104 = arith.constant dense<0.000000e+00> : vector<8x128xf32>
    %137 = tpu.matmul %136, %3, %cst_104 {dimension_numbers = #tpu.dot_dimension_numbers<[1], [0], [0], [1], [0, 0, 1, 1], [], []>} : vector<8x16xf32>, vector<16x128xf32>, vector<8x128xf32> -> vector<8x128xf32>
    %138 = vector.broadcast %6 : vector<1x128xf32> to vector<8x128xf32>
    %139 = arith.addf %137, %138 : vector<8x128xf32>
    %c6_105 = arith.constant 6 : index
    %c0_106 = arith.constant 0 : index
    %c0_107 = arith.constant 0 : index
    %140 = vector.load %arg2[%c6_105, %c0_106, %c0_107] : memref<8x8x128xf32, #tpu.memory_space<vmem>>, vector<1x8x128xf32>
    %141 = vector.shape_cast %140 : vector<1x8x128xf32> to vector<8x128xf32>
    %142 = arith.addf %139, %141 : vector<8x128xf32>
    %cst_108 = arith.constant dense<0.000000e+00> : vector<8x128xf32>
    %143 = tpu.matmul %125, %4, %cst_108 {dimension_numbers = #tpu.dot_dimension_numbers<[1], [0], [0], [1], [0, 0, 1, 1], [], []>} : vector<8x128xf32>, vector<128x128xf32>, vector<8x128xf32> -> vector<8x128xf32>
    %144 = arith.addf %142, %143 : vector<8x128xf32>
    %cst_109 = arith.constant 0.000000e+00 : f32
    %145 = vector.broadcast %cst_109 : f32 to vector<8x128xf32>
    %146 = arith.maximumf %144, %145 : vector<8x128xf32>
    %c6_110 = arith.constant 6 : index
    %c0_111 = arith.constant 0 : index
    %c0_112 = arith.constant 0 : index
    %147 = vector.load %arg9[%c6_110, %c0_111, %c0_112] : memref<8x8x128xf32, #tpu.memory_space<vmem>>, vector<1x8x128xf32>
    %148 = vector.shape_cast %147 : vector<1x8x128xf32> to vector<8x128xf32>
    %149 = vector.shape_cast %146 : vector<8x128xf32> to vector<1x8x128xf32>
    tpu.vector_store %arg9[%c6_110, %c0_111, %c0_112], %149 {strides = array<i32>} : memref<8x8x128xf32, #tpu.memory_space<vmem>>, vector<1x8x128xf32>,
    %cst_113 = arith.constant dense<0.000000e+00> : vector<8x8xf32>
    %150 = tpu.matmul %146, %5, %cst_113 {dimension_numbers = #tpu.dot_dimension_numbers<[1], [0], [0], [1], [0, 0, 1, 1], [], []>} : vector<8x128xf32>, vector<128x8xf32>, vector<8x8xf32> -> vector<8x8xf32>
    %151 = vector.broadcast %7 : vector<1x8xf32> to vector<8x8xf32>
    %152 = arith.addf %150, %151 : vector<8x8xf32>
    %c6_114 = arith.constant 6 : index
    %c0_115 = arith.constant 0 : index
    %c0_116 = arith.constant 0 : index
    %153 = vector.load %arg10[%c6_114, %c0_115, %c0_116] : memref<8x8x8xf32, #tpu.memory_space<vmem>>, vector<1x8x8xf32>
    %154 = vector.shape_cast %153 : vector<1x8x8xf32> to vector<8x8xf32>
    %155 = vector.shape_cast %152 : vector<8x8xf32> to vector<1x8x8xf32>
    tpu.vector_store %arg10[%c6_114, %c0_115, %c0_116], %155 {strides = array<i32>} : memref<8x8x8xf32, #tpu.memory_space<vmem>>, vector<1x8x8xf32>,
    %c7 = arith.constant 7 : index
    %c0_117 = arith.constant 0 : index
    %c0_118 = arith.constant 0 : index
    %156 = vector.load %arg1[%c7, %c0_117, %c0_118] : memref<8x8x16xf32, #tpu.memory_space<vmem>>, vector<1x8x16xf32>
    %157 = vector.shape_cast %156 : vector<1x8x16xf32> to vector<8x16xf32>
    %cst_119 = arith.constant dense<0.000000e+00> : vector<8x128xf32>
    %158 = tpu.matmul %157, %3, %cst_119 {dimension_numbers = #tpu.dot_dimension_numbers<[1], [0], [0], [1], [0, 0, 1, 1], [], []>} : vector<8x16xf32>, vector<16x128xf32>, vector<8x128xf32> -> vector<8x128xf32>
    %159 = vector.broadcast %6 : vector<1x128xf32> to vector<8x128xf32>
    %160 = arith.addf %158, %159 : vector<8x128xf32>
    %c7_120 = arith.constant 7 : index
    %c0_121 = arith.constant 0 : index
    %c0_122 = arith.constant 0 : index
    %161 = vector.load %arg2[%c7_120, %c0_121, %c0_122] : memref<8x8x128xf32, #tpu.memory_space<vmem>>, vector<1x8x128xf32>
    %162 = vector.shape_cast %161 : vector<1x8x128xf32> to vector<8x128xf32>
    %163 = arith.addf %160, %162 : vector<8x128xf32>
    %cst_123 = arith.constant dense<0.000000e+00> : vector<8x128xf32>
    %164 = tpu.matmul %146, %4, %cst_123 {dimension_numbers = #tpu.dot_dimension_numbers<[1], [0], [0], [1], [0, 0, 1, 1], [], []>} : vector<8x128xf32>, vector<128x128xf32>, vector<8x128xf32> -> vector<8x128xf32>
    %165 = arith.addf %163, %164 : vector<8x128xf32>
    %cst_124 = arith.constant 0.000000e+00 : f32
    %166 = vector.broadcast %cst_124 : f32 to vector<8x128xf32>
    %167 = arith.maximumf %165, %166 : vector<8x128xf32>
    %c7_125 = arith.constant 7 : index
    %c0_126 = arith.constant 0 : index
    %c0_127 = arith.constant 0 : index
    %168 = vector.load %arg9[%c7_125, %c0_126, %c0_127] : memref<8x8x128xf32, #tpu.memory_space<vmem>>, vector<1x8x128xf32>
    %169 = vector.shape_cast %168 : vector<1x8x128xf32> to vector<8x128xf32>
    %170 = vector.shape_cast %167 : vector<8x128xf32> to vector<1x8x128xf32>
    tpu.vector_store %arg9[%c7_125, %c0_126, %c0_127], %170 {strides = array<i32>} : memref<8x8x128xf32, #tpu.memory_space<vmem>>, vector<1x8x128xf32>,
    %cst_128 = arith.constant dense<0.000000e+00> : vector<8x8xf32>
    %171 = tpu.matmul %167, %5, %cst_128 {dimension_numbers = #tpu.dot_dimension_numbers<[1], [0], [0], [1], [0, 0, 1, 1], [], []>} : vector<8x128xf32>, vector<128x8xf32>, vector<8x8xf32> -> vector<8x8xf32>
    %172 = vector.broadcast %7 : vector<1x8xf32> to vector<8x8xf32>
    %173 = arith.addf %171, %172 : vector<8x8xf32>
    %c7_129 = arith.constant 7 : index
    %c0_130 = arith.constant 0 : index
    %c0_131 = arith.constant 0 : index
    %174 = vector.load %arg10[%c7_129, %c0_130, %c0_131] : memref<8x8x8xf32, #tpu.memory_space<vmem>>, vector<1x8x8xf32>
    %175 = vector.shape_cast %174 : vector<1x8x8xf32> to vector<8x8xf32>
    %176 = vector.shape_cast %173 : vector<8x8xf32> to vector<1x8x8xf32>
    tpu.vector_store %arg10[%c7_129, %c0_130, %c0_131], %176 {strides = array<i32>} : memref<8x8x8xf32, #tpu.memory_space<vmem>>, vector<1x8x8xf32>,
    %c0_132 = arith.constant 0 : index
    %c0_133 = arith.constant 0 : index
    %177 = vector.load %arg11[%c0_132, %c0_133] : memref<8x128xf32, #tpu.memory_space<vmem>>, vector<8x128xf32>
    tpu.vector_store %arg11[%c0_132, %c0_133], %167 {strides = array<i32>} : memref<8x128xf32, #tpu.memory_space<vmem>>, vector<8x128xf32>,
    return
  }
  func.func @transform_0(%arg0: i32) -> (i32, i32, i32) {
    %c0_i32 = arith.constant 0 : i32
    %c0_i32_0 = arith.constant 0 : i32
    %c0_i32_1 = arith.constant 0 : i32
    return %arg0, %c0_i32, %c0_i32_0 : i32, i32, i32
  }
  func.func @transform_1(%arg0: i32) -> (i32, i32, i32) {
    %c0_i32 = arith.constant 0 : i32
    %c0_i32_0 = arith.constant 0 : i32
    %c0_i32_1 = arith.constant 0 : i32
    return %arg0, %c0_i32, %c0_i32_0 : i32, i32, i32
  }
  func.func @transform_2(%arg0: i32) -> (i32, i32) {
    %c0_i32 = arith.constant 0 : i32
    %c0_i32_0 = arith.constant 0 : i32
    %c0_i32_1 = arith.constant 0 : i32
    return %c0_i32, %c0_i32_0 : i32, i32
  }
  func.func @transform_3(%arg0: i32) -> (i32, i32) {
    %c0_i32 = arith.constant 0 : i32
    %c0_i32_0 = arith.constant 0 : i32
    %c0_i32_1 = arith.constant 0 : i32
    return %c0_i32, %c0_i32_0 : i32, i32
  }
  func.func @transform_4(%arg0: i32) -> (i32, i32) {
    %c0_i32 = arith.constant 0 : i32
    %c0_i32_0 = arith.constant 0 : i32
    %c0_i32_1 = arith.constant 0 : i32
    return %c0_i32, %c0_i32_0 : i32, i32
  }
  func.func @transform_5(%arg0: i32) -> (i32, i32) {
    %c0_i32 = arith.constant 0 : i32
    %c0_i32_0 = arith.constant 0 : i32
    %c0_i32_1 = arith.constant 0 : i32
    return %c0_i32, %c0_i32_0 : i32, i32
  }
  func.func @transform_6(%arg0: i32) -> (i32, i32) {
    %c0_i32 = arith.constant 0 : i32
    %c0_i32_0 = arith.constant 0 : i32
    %c0_i32_1 = arith.constant 0 : i32
    return %c0_i32, %c0_i32_0 : i32, i32
  }
  func.func @transform_7(%arg0: i32) -> (i32, i32) {
    %c0_i32 = arith.constant 0 : i32
    %c0_i32_0 = arith.constant 0 : i32
    %c0_i32_1 = arith.constant 0 : i32
    return %c0_i32, %c0_i32_0 : i32, i32
  }
  func.func @transform_8(%arg0: i32) -> (i32, i32, i32) {
    %c0_i32 = arith.constant 0 : i32
    %c0_i32_0 = arith.constant 0 : i32
    %c0_i32_1 = arith.constant 0 : i32
    return %arg0, %c0_i32, %c0_i32_0 : i32, i32, i32
  }
  func.func @transform_9(%arg0: i32) -> (i32, i32, i32) {
    %c0_i32 = arith.constant 0 : i32
    %c0_i32_0 = arith.constant 0 : i32
    %c0_i32_1 = arith.constant 0 : i32
    return %arg0, %c0_i32, %c0_i32_0 : i32, i32, i32
  }
}

</mosaic_0001>

<llo_original>
// kernel: tpu_custom_call.1
$region0: #{tpu_custom_call.1}
  #allocation0 [shape = 'u32[]', space=smem, size = 0x4, offset = 0x4, fixed_abs, tag = 'smem constant byte address 0x4 - core index']
  #allocation1 [shape = 'u32[144,128]{1,0:T(1,128)}', space=vmem, size = 0x12000, scoped, tag = 'internal scratch']
  #allocation2 [shape = 'f32[8,128]{1,0:T(8,128)}', space=vmem, size = 0x1000, scoped, tag = 'scratch operand']
  %s0 = inlined_call_operand.hbm [shape: f32[8,8,16], index: 0, kind: input, shape index: {}]
  %s1 = inlined_call_operand.hbm [shape: f32[8,8,128], index: 1, kind: input, shape index: {}]
  %s2 = inlined_call_operand.hbm [shape: f32[8,128], index: 2, kind: input, shape index: {}]
  %s3 = inlined_call_operand.vmem [shape: f32[16,128], index: 3, kind: input, shape index: {}]
  %s4 = inlined_call_operand.vmem [shape: f32[128,128], index: 4, kind: input, shape index: {}]
  %s5 = inlined_call_operand.vmem [shape: f32[128,8], index: 5, kind: input, shape index: {}]
  %s6 = inlined_call_operand.vmem [shape: f32[1,128], index: 6, kind: input, shape index: {}]
  %s7 = inlined_call_operand.vmem [shape: f32[1,8], index: 7, kind: input, shape index: {}]
  %s8 = inlined_call_operand.hbm [shape: f32[8,8,128], index: 8, kind: output, shape index: {0}]
  %s9 = inlined_call_operand.hbm [shape: f32[8,8,8], index: 9, kind: output, shape index: {1}]
  %10 = xla_tuple %s8, %s9
  %s11 = sld [smem:[#allocation0]]
  $region66: #{tpu_custom_call.1} parent=0
    _
  %s13 = ssub.s32 1, %s11
  %s14 = scalar_select 0, %s13, %s11
  $region1: #{tpu_custom_call.1} parent=0
    #allocation3 [shape = 'u8[32768]{0}', space=vmem, size = 0x8000, scoped, tag = 'input window, operand 0, single buffered']
    #allocation4 [shape = 's32[1]{0}', space=sflag, size = 0x4, scoped, tag = 'scoped memory for tpu_custom_call.1']
    #allocation5 [shape = 's32[1]{0}', space=sflag, size = 0x4, scoped, tag = 'scoped memory for tpu_custom_call.1']
    #allocation6 [shape = 'u8[32768]{0}', space=vmem, size = 0x8000, scoped, tag = 'input window, operand 1, single buffered']
    #allocation7 [shape = 's32[1]{0}', space=sflag, size = 0x4, scoped, tag = 'scoped memory for tpu_custom_call.1']
    #allocation8 [shape = 'u8[4096]{0}', space=vmem, size = 0x1000, scoped, tag = 'input window, operand 2, single buffered']
    #allocation9 [shape = 'u8[32768]{0}', space=vmem, size = 0x8000, scoped, tag = 'output window, operand 0, single buffered']
    #allocation10 [shape = 'u8[32768]{0}', space=vmem, size = 0x8000, scoped, tag = 'output window, operand 1, single buffered']
    #allocation11 [shape = 's32[1]{0}', space=sflag, size = 0x4, scoped, tag = 'scoped memory for tpu_custom_call.1']
    %15 = vsyncpa [#allocation4], 0
    %16 = vsyncpa [#allocation7], 0
    %17 = vsyncpa [#allocation5], 0
    %18 = vsyncpa [#allocation11], 0
    // Predicated region
    $region2: #{tpu_custom_call.1} parent=1 // pred_check
      _
    $region3: #{tpu_custom_call.1} parent=1 // pred_check_branch
      %20 = sbr.rel (0) target = $region5
    $region4: #{tpu_custom_call.1} parent=1 // pred_region
      %s22 = ssub.s32 1024, 1024
      %23 = vsyncadd [#allocation4], %s22
      %s24 = sshll.u32 [#allocation3], 4
      %s25 = int_to_ptr.vmem [resolvable:$true] %s24
      %30 = dma.hbm_to_vmem [thread:$0]  %s0, 1024, %s25, [#allocation4], 128, 128, 8
    $region5: #{tpu_custom_call.1} parent=1 // pred_fallthru
      _
    // Predicated region
    $region6: #{tpu_custom_call.1} parent=1 // pred_check
      _
    $region7: #{tpu_custom_call.1} parent=1 // pred_check_branch
      %32 = sbr.rel (0) target = $region9
    $region8: #{tpu_custom_call.1} parent=1 // pred_region
      %s34 = ssub.s32 1024, 1024
      %35 = vsyncadd [#allocation7], %s34
      %s36 = sshll.u32 [#allocation6], 4
      %s37 = int_to_ptr.vmem [resolvable:$true] %s36
      %42 = dma.hbm_to_vmem [thread:$0]  %s1, 1024, %s37, [#allocation7], 128, 128, 8
    $region9: #{tpu_custom_call.1} parent=1 // pred_fallthru
      _
    // Predicated region
    $region10: #{tpu_custom_call.1} parent=1 // pred_check
      _
    $region11: #{tpu_custom_call.1} parent=1 // pred_check_branch
      %44 = sbr.rel (0) target = $region13
    $region12: #{tpu_custom_call.1} parent=1 // pred_region
      %s46 = ssub.s32 128, 128
      %47 = vsyncadd [#allocation7], %s46
      %s49 = sshll.u32 [#allocation8], 4
      %s50 = int_to_ptr.vmem [resolvable:$true] %s49
      %52 = dma.hbm_to_vmem [thread:$0]  %s2, 128, %s50, [#allocation7]
    $region13: #{tpu_custom_call.1} parent=1 // pred_fallthru
      _
    // Predicated region
    $region14: #{tpu_custom_call.1} parent=1 // pred_check
      _
    $region15: #{tpu_custom_call.1} parent=1 // pred_check_branch
      %54 = sbr.rel (0) target = $region17
    $region16: #{tpu_custom_call.1} parent=1 // pred_region
      _
    $region17: #{tpu_custom_call.1} parent=1 // pred_fallthru
      _
    // Predicated region
    $region18: #{tpu_custom_call.1} parent=1 // pred_check
      _
    $region19: #{tpu_custom_call.1} parent=1 // pred_check_branch
      %56 = sbr.rel (0) target = $region21
    $region20: #{tpu_custom_call.1} parent=1 // pred_region
      _
    $region21: #{tpu_custom_call.1} parent=1 // pred_fallthru
      _
    // Predicated region
    $region22: #{tpu_custom_call.1} parent=1 // pred_check
      _
    $region23: #{tpu_custom_call.1} parent=1 // pred_check_branch
      %58 = sbr.rel (0) target = $region25
    $region24: #{tpu_custom_call.1} parent=1 // pred_region
      _
    $region25: #{tpu_custom_call.1} parent=1 // pred_fallthru
      _
    // Predicated region
    $region26: #{tpu_custom_call.1} parent=1 // pred_check
      _
    $region27: #{tpu_custom_call.1} parent=1 // pred_check_branch
      %60 = sbr.rel (0) target = $region29
    $region28: #{tpu_custom_call.1} parent=1 // pred_region
      _
    $region29: #{tpu_custom_call.1} parent=1 // pred_fallthru
      _
    // Predicated region
    $region30: #{tpu_custom_call.1} parent=1 // pred_check
      _
    $region31: #{tpu_custom_call.1} parent=1 // pred_check_branch
      %62 = sbr.rel (0) target = $region33
    $region32: #{tpu_custom_call.1} parent=1 // pred_region
      _
    $region33: #{tpu_custom_call.1} parent=1 // pred_fallthru
      _
    // Predicated region
    $region34: #{tpu_custom_call.1} parent=1 // pred_check
      _
    $region35: #{tpu_custom_call.1} parent=1 // pred_check_branch
      %64 = sbr.rel (0) target = $region37
    $region36: #{tpu_custom_call.1} parent=1 // pred_region
      %65 = dma.done [#allocation4], 1024
    $region37: #{tpu_custom_call.1} parent=1 // pred_fallthru
      _
    // Predicated region
    $region38: #{tpu_custom_call.1} parent=1 // pred_check
      _
    $region39: #{tpu_custom_call.1} parent=1 // pred_check_branch
      %67 = sbr.rel (0) target = $region41
    $region40: #{tpu_custom_call.1} parent=1 // pred_region
      %68 = dma.done [#allocation7], 1024
    $region41: #{tpu_custom_call.1} parent=1 // pred_fallthru
      _
    // Predicated region
    $region42: #{tpu_custom_call.1} parent=1 // pred_check
      _
    $region43: #{tpu_custom_call.1} parent=1 // pred_check_branch
      %70 = sbr.rel (0) target = $region45
    $region44: #{tpu_custom_call.1} parent=1 // pred_region
      %71 = dma.done [#allocation7], 128
    $region45: #{tpu_custom_call.1} parent=1 // pred_fallthru
      _
    %p72 = scmp.eq.s32.totalorder 0, 0
    // Predicated region
    $region46: #{tpu_custom_call.1} parent=1 // pred_check
      %p73 = pneg %p72
    $region47: #{tpu_custom_call.1} parent=1 // pred_check_branch
      %75 = sbr.rel (%p73) target = $region49
    $region48: #{tpu_custom_call.1} parent=1 // pred_region
      %v76 = vld [vmem:[#allocation8] sm:$0xff]
      %77 = vst [vmem:[#allocation2] sm:$0xff] %v76
    $region49: #{tpu_custom_call.1} parent=1 // pred_fallthru
      _
    %v78 = vld [vmem:[%s3] sm:$0xff]
    %v79 = vld [vmem:[%s3 + $0x8] sm:$0xff]
    %v80 = vld [vmem:[%s4] sm:$0xff]
    %v81 = vld [vmem:[%s4 + $0x8] sm:$0xff]
    %v82 = vld [vmem:[%s4 + $0x10] sm:$0xff]
    %v83 = vld [vmem:[%s4 + $0x18] sm:$0xff]
    %v84 = vld [vmem:[%s4 + $0x20] sm:$0xff]
    %v85 = vld [vmem:[%s4 + $0x28] sm:$0xff]
    %v86 = vld [vmem:[%s4 + $0x30] sm:$0xff]
    %v87 = vld [vmem:[%s4 + $0x38] sm:$0xff]
    %v88 = vld [vmem:[%s4 + $0x40] sm:$0xff]
    %v89 = vld [vmem:[%s4 + $0x48] sm:$0xff]
    %v90 = vld [vmem:[%s4 + $0x50] sm:$0xff]
    %v91 = vld [vmem:[%s4 + $0x58] sm:$0xff]
    %v92 = vld [vmem:[%s4 + $0x60] sm:$0xff]
    %v93 = vld [vmem:[%s4 + $0x68] sm:$0xff]
    %v94 = vld [vmem:[%s4 + $0x70] sm:$0xff]
    %v95 = vld [vmem:[%s4 + $0x78] sm:$0xff]
    %v96 = vld [vmem:[%s5] sm:$0xff]
    %v97 = vld [vmem:[%s5 + $0x8] sm:$0xff]
    %v98 = vld [vmem:[%s5 + $0x10] sm:$0xff]
    %v99 = vld [vmem:[%s5 + $0x18] sm:$0xff]
    %v100 = vld [vmem:[%s5 + $0x20] sm:$0xff]
    %v101 = vld [vmem:[%s5 + $0x28] sm:$0xff]
    %v102 = vld [vmem:[%s5 + $0x30] sm:$0xff]
    %v103 = vld [vmem:[%s5 + $0x38] sm:$0xff]
    %v104 = vld [vmem:[%s5 + $0x40] sm:$0xff]
    %v105 = vld [vmem:[%s5 + $0x48] sm:$0xff]
    %v106 = vld [vmem:[%s5 + $0x50] sm:$0xff]
    %v107 = vld [vmem:[%s5 + $0x58] sm:$0xff]
    %v108 = vld [vmem:[%s5 + $0x60] sm:$0xff]
    %v109 = vld [vmem:[%s5 + $0x68] sm:$0xff]
    %v110 = vld [vmem:[%s5 + $0x70] sm:$0xff]
    %v111 = vld [vmem:[%s5 + $0x78] sm:$0xff]
    %v112 = vld [vmem:[%s6] sm:$0x1]
    %v113 = vld [vmem:[%s7] sm:$0x1]
    %v114 = vld [vmem:[#allocation2] sm:$0xff]
    %v115 = vld [vmem:[#allocation3] sm:$0xff]
    %v117 = vlaneseq
    %v118 = vshrl.u32 %v117, 7
    %v119 = vsub.s32 0, %v118
    %v120 = vrot.slane %v112, %v119
    %vm122 = vcmask 130048
    %v124 = vsel %vm122, %v115, 0
    %126 = vmatprep.subr.mxu0 0.0
    %127 = vmatpush1.msra.mxu0 %v78
    %128 = vmatprep.subr.mxu0 0.0
    %129 = vmatpush1.msra.mxu0 %v79
    %130 = vmatprep.subr.mxu0 0.0
    %131 = vmatpush1.msra.mxu0 0.0
    %132 = vmatprep.subr.mxu0 0.0
    %133 = vmatpush1.msra.mxu0 0.0
    %134 = vmatprep.subr.mxu0 0.0
    %135 = vmatpush1.msra.mxu0 0.0
    %136 = vmatprep.subr.mxu0 0.0
    %137 = vmatpush1.msra.mxu0 0.0
    %138 = vmatprep.subr.mxu0 0.0
    %139 = vmatpush1.msra.mxu0 0.0
    %140 = vmatprep.subr.mxu0 0.0
    %141 = vmatpush1.msra.mxu0 0.0
    %142 = vmatprep.subr.mxu0 0.0
    %143 = vmatpush1.msra.mxu0 0.0
    %144 = vmatprep.subr.mxu0 0.0
    %145 = vmatpush1.msra.mxu0 0.0
    %146 = vmatprep.subr.mxu0 0.0
    %147 = vmatpush1.msra.mxu0 0.0
    %148 = vmatprep.subr.mxu0 0.0
    %149 = vmatpush1.msra.mxu0 0.0
    %150 = vmatprep.subr.mxu0 0.0
    %151 = vmatpush1.msra.mxu0 0.0
    %152 = vmatprep.subr.mxu0 0.0
    %153 = vmatpush1.msra.mxu0 0.0
    %154 = vmatprep.subr.mxu0 0.0
    %155 = vmatpush1.msra.mxu0 0.0
    %156 = vmatprep.subr.mxu0 0.0
    %157 = vmatpush1.msra.mxu0 0.0
    %158 = vmatprep.subr.mxu0 0.0
    %159 = vmatpush1.msra.mxu0 0.0
    %160 = vmatprep.subr.mxu0 0.0
    %161 = vmatpush1.msra.mxu0 0.0
    %162 = vmatprep.subr.mxu0 0.0
    %163 = vmatpush1.msra.mxu0 0.0
    %164 = vmatprep.subr.mxu0 0.0
    %165 = vmatpush1.msra.mxu0 0.0
    %166 = vmatprep.subr.mxu0 0.0
    %167 = vmatpush1.msra.mxu0 0.0
    %168 = vmatprep.subr.mxu0 0.0
    %169 = vmatpush1.msra.mxu0 0.0
    %170 = vmatprep.subr.mxu0 0.0
    %171 = vmatpush1.msra.mxu0 0.0
    %172 = vmatprep.subr.mxu0 0.0
    %173 = vmatpush1.msra.mxu0 0.0
    %174 = vmatprep.subr.mxu0 0.0
    %175 = vmatpush1.msra.mxu0 0.0
    %176 = vmatprep.subr.mxu0 0.0
    %177 = vmatpush1.msra.mxu0 0.0
    %178 = vmatprep.subr.mxu0 0.0
    %179 = vmatpush1.msra.mxu0 0.0
    %180 = vmatprep.subr.mxu0 0.0
    %181 = vmatpush1.msra.mxu0 0.0
    %182 = vmatprep.subr.mxu0 0.0
    %183 = vmatpush1.msra.mxu0 0.0
    %184 = vmatprep.subr.mxu0 0.0
    %185 = vmatpush1.msra.mxu0 0.0
    %186 = vmatprep.subr.mxu0 0.0
    %187 = vmatpush1.msra.mxu0 0.0
    %188 = vmatprep.subr.mxu0 0.0
    %189 = vmatpush1.msra.mxu0 0.0
    %190 = vmatprep.mubr.f32.mxu0 0.0
    %191 = vmatmul.mubr.f32.gmra.mrb[0].mxu0 %v124
    %v192 = vpop.f32.mrb[0].mxu0
    %v193 = vadd.f32 %v120, %v192
    %v194 = vpop.f32.mrb[0].mxu0
    %195 = vdwg.mxu0
    %v196 = vld [vmem:[#allocation6] sm:$0xff]
    %v197 = vadd.f32 %v193, %v196
    %198 = vmatprep.subr.mxu0 0.0
    %199 = vmatpush1.msra.mxu0 %v80
    %200 = vmatprep.subr.mxu0 0.0
    %201 = vmatpush1.msra.mxu0 %v81
    %202 = vmatprep.subr.mxu0 0.0
    %203 = vmatpush1.msra.mxu0 %v82
    %204 = vmatprep.subr.mxu0 0.0
    %205 = vmatpush1.msra.mxu0 %v83
    %206 = vmatprep.subr.mxu0 0.0
    %207 = vmatpush1.msra.mxu0 %v84
    %208 = vmatprep.subr.mxu0 0.0
    %209 = vmatpush1.msra.mxu0 %v85
    %210 = vmatprep.subr.mxu0 0.0
    %211 = vmatpush1.msra.mxu0 %v86
    %212 = vmatprep.subr.mxu0 0.0
    %213 = vmatpush1.msra.mxu0 %v87
    %214 = vmatprep.subr.mxu0 0.0
    %215 = vmatpush1.msra.mxu0 %v88
    %216 = vmatprep.subr.mxu0 0.0
    %217 = vmatpush1.msra.mxu0 %v89
    %218 = vmatprep.subr.mxu0 0.0
    %219 = vmatpush1.msra.mxu0 %v90
    %220 = vmatprep.subr.mxu0 0.0
    %221 = vmatpush1.msra.mxu0 %v91
    %222 = vmatprep.subr.mxu0 0.0
    %223 = vmatpush1.msra.mxu0 %v92
    %224 = vmatprep.subr.mxu0 0.0
    %225 = vmatpush1.msra.mxu0 %v93
    %226 = vmatprep.subr.mxu0 0.0
    %227 = vmatpush1.msra.mxu0 %v94
    %228 = vmatprep.subr.mxu0 0.0
    %229 = vmatpush1.msra.mxu0 %v95
    %230 = vmatprep.subr.mxu0 0.0
    %231 = vmatpush1.msra.mxu0 0.0
    %232 = vmatprep.subr.mxu0 0.0
    %233 = vmatpush1.msra.mxu0 0.0
    %234 = vmatprep.subr.mxu0 0.0
    %235 = vmatpush1.msra.mxu0 0.0
    %236 = vmatprep.subr.mxu0 0.0
    %237 = vmatpush1.msra.mxu0 0.0
    %238 = vmatprep.subr.mxu0 0.0
    %239 = vmatpush1.msra.mxu0 0.0
    %240 = vmatprep.subr.mxu0 0.0
    %241 = vmatpush1.msra.mxu0 0.0
    %242 = vmatprep.subr.mxu0 0.0
    %243 = vmatpush1.msra.mxu0 0.0
    %244 = vmatprep.subr.mxu0 0.0
    %245 = vmatpush1.msra.mxu0 0.0
    %246 = vmatprep.subr.mxu0 0.0
    %247 = vmatpush1.msra.mxu0 0.0
    %248 = vmatprep.subr.mxu0 0.0
    %249 = vmatpush1.msra.mxu0 0.0
    %250 = vmatprep.subr.mxu0 0.0
    %251 = vmatpush1.msra.mxu0 0.0
    %252 = vmatprep.subr.mxu0 0.0
    %253 = vmatpush1.msra.mxu0 0.0
    %254 = vmatprep.subr.mxu0 0.0
    %255 = vmatpush1.msra.mxu0 0.0
    %256 = vmatprep.subr.mxu0 0.0
    %257 = vmatpush1.msra.mxu0 0.0
    %258 = vmatprep.subr.mxu0 0.0
    %259 = vmatpush1.msra.mxu0 0.0
    %260 = vmatprep.subr.mxu0 0.0
    %261 = vmatpush1.msra.mxu0 0.0
    %262 = vmatprep.mubr.f32.mxu0 0.0
    %263 = vmatmul.mubr.f32.gmra.mrb[0].mxu0 %v114
    %v264 = vpop.f32.mrb[0].mxu0
    %v265 = vadd.f32 0.0, %v264
    %v266 = vpop.f32.mrb[0].mxu0
    %267 = vdwg.mxu0
    %v268 = vadd.f32 %v197, %v265
    %v269 = vmax.f32 %v268, 0.0
    %270 = vst [vmem:[#allocation9] sm:$0xff] %v269
    %v272 = vlaneseq
    %v273 = vshrl.u32 %v272, 7
    %v274 = vsub.s32 0, %v273
    %v275 = vrot.slane %v113, %v274
    %277 = vmatprep.subr.mxu0 0.0
    %278 = vmatpush1.msra.mxu0 %v96
    %279 = vmatprep.subr.mxu0 0.0
    %280 = vmatpush1.msra.mxu0 %v97
    %281 = vmatprep.subr.mxu0 0.0
    %282 = vmatpush1.msra.mxu0 %v98
    %283 = vmatprep.subr.mxu0 0.0
    %284 = vmatpush1.msra.mxu0 %v99
    %285 = vmatprep.subr.mxu0 0.0
    %286 = vmatpush1.msra.mxu0 %v100
    %287 = vmatprep.subr.mxu0 0.0
    %288 = vmatpush1.msra.mxu0 %v101
    %289 = vmatprep.subr.mxu0 0.0
    %290 = vmatpush1.msra.mxu0 %v102
    %291 = vmatprep.subr.mxu0 0.0
    %292 = vmatpush1.msra.mxu0 %v103
    %293 = vmatprep.subr.mxu0 0.0
    %294 = vmatpush1.msra.mxu0 %v104
    %295 = vmatprep.subr.mxu0 0.0
    %296 = vmatpush1.msra.mxu0 %v105
    %297 = vmatprep.subr.mxu0 0.0
    %298 = vmatpush1.msra.mxu0 %v106
    %299 = vmatprep.subr.mxu0 0.0
    %300 = vmatpush1.msra.mxu0 %v107
    %301 = vmatprep.subr.mxu0 0.0
    %302 = vmatpush1.msra.mxu0 %v108
    %303 = vmatprep.subr.mxu0 0.0
    %304 = vmatpush1.msra.mxu0 %v109
    %305 = vmatprep.subr.mxu0 0.0
    %306 = vmatpush1.msra.mxu0 %v110
    %307 = vmatprep.subr.mxu0 0.0
    %308 = vmatpush1.msra.mxu0 %v111
    %309 = vmatprep.subr.mxu0 0.0
    %310 = vmatpush1.msra.mxu0 0.0
    %311 = vmatprep.subr.mxu0 0.0
    %312 = vmatpush1.msra.mxu0 0.0
    %313 = vmatprep.subr.mxu0 0.0
    %314 = vmatpush1.msra.mxu0 0.0
    %315 = vmatprep.subr.mxu0 0.0
    %316 = vmatpush1.msra.mxu0 0.0
    %317 = vmatprep.subr.mxu0 0.0
    %318 = vmatpush1.msra.mxu0 0.0
    %319 = vmatprep.subr.mxu0 0.0
    %320 = vmatpush1.msra.mxu0 0.0
    %321 = vmatprep.subr.mxu0 0.0
    %322 = vmatpush1.msra.mxu0 0.0
    %323 = vmatprep.subr.mxu0 0.0
    %324 = vmatpush1.msra.mxu0 0.0
    %325 = vmatprep.subr.mxu0 0.0
    %326 = vmatpush1.msra.mxu0 0.0
    %327 = vmatprep.subr.mxu0 0.0
    %328 = vmatpush1.msra.mxu0 0.0
    %329 = vmatprep.subr.mxu0 0.0
    %330 = vmatpush1.msra.mxu0 0.0
    %331 = vmatprep.subr.mxu0 0.0
    %332 = vmatpush1.msra.mxu0 0.0
    %333 = vmatprep.subr.mxu0 0.0
    %334 = vmatpush1.msra.mxu0 0.0
    %335 = vmatprep.subr.mxu0 0.0
    %336 = vmatpush1.msra.mxu0 0.0
    %337 = vmatprep.subr.mxu0 0.0
    %338 = vmatpush1.msra.mxu0 0.0
    %339 = vmatprep.subr.mxu0 0.0
    %340 = vmatpush1.msra.mxu0 0.0
    %341 = vmatprep.mubr.f32.mxu0 0.0
    %342 = vmatmul.mubr.f32.gmra.mrb[0].mxu0 %v269
    %v343 = vpop.f32.mrb[0].mxu0
    %v344 = vadd.f32 %v275, %v343
    %v345 = vpop.f32.mrb[0].mxu0
    %346 = vdwg.mxu0
    %vm347 = vcmask 64512
    %348 = vst.msk [vmem:[#allocation10] sm:$0xff] %vm347, %v344
    %s349 = scalar_lea.vmem [#allocation3], 8
    %v350 = vld [vmem:[%s349] sm:$0xff]
    %v352 = vsel %vm122, %v350, 0
    %354 = vmatprep.subr.mxu0 0.0
    %355 = vmatpush1.msra.mxu0 %v78
    %356 = vmatprep.subr.mxu0 0.0
    %357 = vmatpush1.msra.mxu0 %v79
    %358 = vmatprep.subr.mxu0 0.0
    %359 = vmatpush1.msra.mxu0 0.0
    %360 = vmatprep.subr.mxu0 0.0
    %361 = vmatpush1.msra.mxu0 0.0
    %362 = vmatprep.subr.mxu0 0.0
    %363 = vmatpush1.msra.mxu0 0.0
    %364 = vmatprep.subr.mxu0 0.0
    %365 = vmatpush1.msra.mxu0 0.0
    %366 = vmatprep.subr.mxu0 0.0
    %367 = vmatpush1.msra.mxu0 0.0
    %368 = vmatprep.subr.mxu0 0.0
    %369 = vmatpush1.msra.mxu0 0.0
    %370 = vmatprep.subr.mxu0 0.0
    %371 = vmatpush1.msra.mxu0 0.0
    %372 = vmatprep.subr.mxu0 0.0
    %373 = vmatpush1.msra.mxu0 0.0
    %374 = vmatprep.subr.mxu0 0.0
    %375 = vmatpush1.msra.mxu0 0.0
    %376 = vmatprep.subr.mxu0 0.0
    %377 = vmatpush1.msra.mxu0 0.0
    %378 = vmatprep.subr.mxu0 0.0
    %379 = vmatpush1.msra.mxu0 0.0
    %380 = vmatprep.subr.mxu0 0.0
    %381 = vmatpush1.msra.mxu0 0.0
    %382 = vmatprep.subr.mxu0 0.0
    %383 = vmatpush1.msra.mxu0 0.0
    %384 = vmatprep.subr.mxu0 0.0
    %385 = vmatpush1.msra.mxu0 0.0
    %386 = vmatprep.subr.mxu0 0.0
    %387 = vmatpush1.msra.mxu0 0.0
    %388 = vmatprep.subr.mxu0 0.0
    %389 = vmatpush1.msra.mxu0 0.0
    %390 = vmatprep.subr.mxu0 0.0
    %391 = vmatpush1.msra.mxu0 0.0
    %392 = vmatprep.subr.mxu0 0.0
    %393 = vmatpush1.msra.mxu0 0.0
    %394 = vmatprep.subr.mxu0 0.0
    %395 = vmatpush1.msra.mxu0 0.0
    %396 = vmatprep.subr.mxu0 0.0
    %397 = vmatpush1.msra.mxu0 0.0
    %398 = vmatprep.subr.mxu0 0.0
    %399 = vmatpush1.msra.mxu0 0.0
    %400 = vmatprep.subr.mxu0 0.0
    %401 = vmatpush1.msra.mxu0 0.0
    %402 = vmatprep.subr.mxu0 0.0
    %403 = vmatpush1.msra.mxu0 0.0
    %404 = vmatprep.subr.mxu0 0.0
    %405 = vmatpush1.msra.mxu0 0.0
    %406 = vmatprep.subr.mxu0 0.0
    %407 = vmatpush1.msra.mxu0 0.0
    %408 = vmatprep.subr.mxu0 0.0
    %409 = vmatpush1.msra.mxu0 0.0
    %410 = vmatprep.subr.mxu0 0.0
    %411 = vmatpush1.msra.mxu0 0.0
    %412 = vmatprep.subr.mxu0 0.0
    %413 = vmatpush1.msra.mxu0 0.0
    %414 = vmatprep.subr.mxu0 0.0
    %415 = vmatpush1.msra.mxu0 0.0
    %416 = vmatprep.subr.mxu0 0.0
    %417 = vmatpush1.msra.mxu0 0.0
    %418 = vmatprep.mubr.f32.mxu0 0.0
    %419 = vmatmul.mubr.f32.gmra.mrb[0].mxu0 %v352
    %v420 = vpop.f32.mrb[0].mxu0
    %v421 = vadd.f32 %v120, %v420
    %v422 = vpop.f32.mrb[0].mxu0
    %423 = vdwg.mxu0
    %s424 = scalar_lea.vmem [#allocation6], 8
    %v425 = vld [vmem:[%s424] sm:$0xff]
    %v426 = vadd.f32 %v421, %v425
    %427 = vmatprep.subr.mxu0 0.0
    %428 = vmatpush1.msra.mxu0 %v80
    %429 = vmatprep.subr.mxu0 0.0
    %430 = vmatpush1.msra.mxu0 %v81
    %431 = vmatprep.subr.mxu0 0.0
    %432 = vmatpush1.msra.mxu0 %v82
    %433 = vmatprep.subr.mxu0 0.0
    %434 = vmatpush1.msra.mxu0 %v83
    %435 = vmatprep.subr.mxu0 0.0
    %436 = vmatpush1.msra.mxu0 %v84
    %437 = vmatprep.subr.mxu0 0.0
    %438 = vmatpush1.msra.mxu0 %v85
    %439 = vmatprep.subr.mxu0 0.0
    %440 = vmatpush1.msra.mxu0 %v86
    %441 = vmatprep.subr.mxu0 0.0
    %442 = vmatpush1.msra.mxu0 %v87
    %443 = vmatprep.subr.mxu0 0.0
    %444 = vmatpush1.msra.mxu0 %v88
    %445 = vmatprep.subr.mxu0 0.0
    %446 = vmatpush1.msra.mxu0 %v89
    %447 = vmatprep.subr.mxu0 0.0
    %448 = vmatpush1.msra.mxu0 %v90
    %449 = vmatprep.subr.mxu0 0.0
    %450 = vmatpush1.msra.mxu0 %v91
    %451 = vmatprep.subr.mxu0 0.0
    %452 = vmatpush1.msra.mxu0 %v92
    %453 = vmatprep.subr.mxu0 0.0
    %454 = vmatpush1.msra.mxu0 %v93
    %455 = vmatprep.subr.mxu0 0.0
    %456 = vmatpush1.msra.mxu0 %v94
    %457 = vmatprep.subr.mxu0 0.0
    %458 = vmatpush1.msra.mxu0 %v95
    %459 = vmatprep.subr.mxu0 0.0
    %460 = vmatpush1.msra.mxu0 0.0
    %461 = vmatprep.subr.mxu0 0.0
    %462 = vmatpush1.msra.mxu0 0.0
    %463 = vmatprep.subr.mxu0 0.0
    %464 = vmatpush1.msra.mxu0 0.0
    %465 = vmatprep.subr.mxu0 0.0
    %466 = vmatpush1.msra.mxu0 0.0
    %467 = vmatprep.subr.mxu0 0.0
    %468 = vmatpush1.msra.mxu0 0.0
    %469 = vmatprep.subr.mxu0 0.0
    %470 = vmatpush1.msra.mxu0 0.0
    %471 = vmatprep.subr.mxu0 0.0
    %472 = vmatpush1.msra.mxu0 0.0
    %473 = vmatprep.subr.mxu0 0.0
    %474 = vmatpush1.msra.mxu0 0.0
    %475 = vmatprep.subr.mxu0 0.0
    %476 = vmatpush1.msra.mxu0 0.0
    %477 = vmatprep.subr.mxu0 0.0
    %478 = vmatpush1.msra.mxu0 0.0
    %479 = vmatprep.subr.mxu0 0.0
    %480 = vmatpush1.msra.mxu0 0.0
    %481 = vmatprep.subr.mxu0 0.0
    %482 = vmatpush1.msra.mxu0 0.0
    %483 = vmatprep.subr.mxu0 0.0
    %484 = vmatpush1.msra.mxu0 0.0
    %485 = vmatprep.subr.mxu0 0.0
    %486 = vmatpush1.msra.mxu0 0.0
    %487 = vmatprep.subr.mxu0 0.0
    %488 = vmatpush1.msra.mxu0 0.0
    %489 = vmatprep.subr.mxu0 0.0
    %490 = vmatpush1.msra.mxu0 0.0
    %491 = vmatprep.mubr.f32.mxu0 0.0
    %492 = vmatmul.mubr.f32.gmra.mrb[0].mxu0 %v269
    %v493 = vpop.f32.mrb[0].mxu0
    %v494 = vadd.f32 0.0, %v493
    %v495 = vpop.f32.mrb[0].mxu0
    %496 = vdwg.mxu0
    %v497 = vadd.f32 %v426, %v494
    %v498 = vmax.f32 %v497, 0.0
    %s499 = scalar_lea.vmem [#allocation9], 8
    %500 = vst [vmem:[%s499] sm:$0xff] %v498
    %501 = vmatprep.subr.mxu0 0.0
    %502 = vmatpush1.msra.mxu0 %v96
    %503 = vmatprep.subr.mxu0 0.0
    %504 = vmatpush1.msra.mxu0 %v97
    %505 = vmatprep.subr.mxu0 0.0
    %506 = vmatpush1.msra.mxu0 %v98
    %507 = vmatprep.subr.mxu0 0.0
    %508 = vmatpush1.msra.mxu0 %v99
    %509 = vmatprep.subr.mxu0 0.0
    %510 = vmatpush1.msra.mxu0 %v100
    %511 = vmatprep.subr.mxu0 0.0
    %512 = vmatpush1.msra.mxu0 %v101
    %513 = vmatprep.subr.mxu0 0.0
    %514 = vmatpush1.msra.mxu0 %v102
    %515 = vmatprep.subr.mxu0 0.0
    %516 = vmatpush1.msra.mxu0 %v103
    %517 = vmatprep.subr.mxu0 0.0
    %518 = vmatpush1.msra.mxu0 %v104
    %519 = vmatprep.subr.mxu0 0.0
    %520 = vmatpush1.msra.mxu0 %v105
    %521 = vmatprep.subr.mxu0 0.0
    %522 = vmatpush1.msra.mxu0 %v106
    %523 = vmatprep.subr.mxu0 0.0
    %524 = vmatpush1.msra.mxu0 %v107
    %525 = vmatprep.subr.mxu0 0.0
    %526 = vmatpush1.msra.mxu0 %v108
    %527 = vmatprep.subr.mxu0 0.0
    %528 = vmatpush1.msra.mxu0 %v109
    %529 = vmatprep.subr.mxu0 0.0
    %530 = vmatpush1.msra.mxu0 %v110
    %531 = vmatprep.subr.mxu0 0.0
    %532 = vmatpush1.msra.mxu0 %v111
    %533 = vmatprep.subr.mxu0 0.0
    %534 = vmatpush1.msra.mxu0 0.0
    %535 = vmatprep.subr.mxu0 0.0
    %536 = vmatpush1.msra.mxu0 0.0
    %537 = vmatprep.subr.mxu0 0.0
    %538 = vmatpush1.msra.mxu0 0.0
    %539 = vmatprep.subr.mxu0 0.0
    %540 = vmatpush1.msra.mxu0 0.0
    %541 = vmatprep.subr.mxu0 0.0
    %542 = vmatpush1.msra.mxu0 0.0
    %543 = vmatprep.subr.mxu0 0.0
    %544 = vmatpush1.msra.mxu0 0.0
    %545 = vmatprep.subr.mxu0 0.0
    %546 = vmatpush1.msra.mxu0 0.0
    %547 = vmatprep.subr.mxu0 0.0
    %548 = vmatpush1.msra.mxu0 0.0
    %549 = vmatprep.subr.mxu0 0.0
    %550 = vmatpush1.msra.mxu0 0.0
    %551 = vmatprep.subr.mxu0 0.0
    %552 = vmatpush1.msra.mxu0 0.0
    %553 = vmatprep.subr.mxu0 0.0
    %554 = vmatpush1.msra.mxu0 0.0
    %555 = vmatprep.subr.mxu0 0.0
    %556 = vmatpush1.msra.mxu0 0.0
    %557 = vmatprep.subr.mxu0 0.0
    %558 = vmatpush1.msra.mxu0 0.0
    %559 = vmatprep.subr.mxu0 0.0
    %560 = vmatpush1.msra.mxu0 0.0
    %561 = vmatprep.subr.mxu0 0.0
    %562 = vmatpush1.msra.mxu0 0.0
    %563 = vmatprep.subr.mxu0 0.0
    %564 = vmatpush1.msra.mxu0 0.0
    %565 = vmatprep.mubr.f32.mxu0 0.0
    %566 = vmatmul.mubr.f32.gmra.mrb[0].mxu0 %v498
    %v567 = vpop.f32.mrb[0].mxu0
    %v568 = vadd.f32 %v275, %v567
    %v569 = vpop.f32.mrb[0].mxu0
    %570 = vdwg.mxu0
    %s571 = scalar_lea.vmem [#allocation10], 8
    %572 = vst.msk [vmem:[%s571] sm:$0xff] %vm347, %v568
    %s573 = scalar_lea.vmem [#allocation3], 16
    %v574 = vld [vmem:[%s573] sm:$0xff]
    %v576 = vsel %vm122, %v574, 0
    %578 = vmatprep.subr.mxu0 0.0
    %579 = vmatpush1.msra.mxu0 %v78
    %580 = vmatprep.subr.mxu0 0.0
    %581 = vmatpush1.msra.mxu0 %v79
    %582 = vmatprep.subr.mxu0 0.0
    %583 = vmatpush1.msra.mxu0 0.0
    %584 = vmatprep.subr.mxu0 0.0
    %585 = vmatpush1.msra.mxu0 0.0
    %586 = vmatprep.subr.mxu0 0.0
    %587 = vmatpush1.msra.mxu0 0.0
    %588 = vmatprep.subr.mxu0 0.0
    %589 = vmatpush1.msra.mxu0 0.0
    %590 = vmatprep.subr.mxu0 0.0
    %591 = vmatpush1.msra.mxu0 0.0
    %592 = vmatprep.subr.mxu0 0.0
    %593 = vmatpush1.msra.mxu0 0.0
    %594 = vmatprep.subr.mxu0 0.0
    %595 = vmatpush1.msra.mxu0 0.0
    %596 = vmatprep.subr.mxu0 0.0
    %597 = vmatpush1.msra.mxu0 0.0
    %598 = vmatprep.subr.mxu0 0.0
    %599 = vmatpush1.msra.mxu0 0.0
    %600 = vmatprep.subr.mxu0 0.0
    %601 = vmatpush1.msra.mxu0 0.0
    %602 = vmatprep.subr.mxu0 0.0
    %603 = vmatpush1.msra.mxu0 0.0
    %604 = vmatprep.subr.mxu0 0.0
    %605 = vmatpush1.msra.mxu0 0.0
    %606 = vmatprep.subr.mxu0 0.0
    %607 = vmatpush1.msra.mxu0 0.0
    %608 = vmatprep.subr.mxu0 0.0
    %609 = vmatpush1.msra.mxu0 0.0
    %610 = vmatprep.subr.mxu0 0.0
    %611 = vmatpush1.msra.mxu0 0.0
    %612 = vmatprep.subr.mxu0 0.0
    %613 = vmatpush1.msra.mxu0 0.0
    %614 = vmatprep.subr.mxu0 0.0
    %615 = vmatpush1.msra.mxu0 0.0
    %616 = vmatprep.subr.mxu0 0.0
    %617 = vmatpush1.msra.mxu0 0.0
    %618 = vmatprep.subr.mxu0 0.0
    %619 = vmatpush1.msra.mxu0 0.0
    %620 = vmatprep.subr.mxu0 0.0
    %621 = vmatpush1.msra.mxu0 0.0
    %622 = vmatprep.subr.mxu0 0.0
    %623 = vmatpush1.msra.mxu0 0.0
    %624 = vmatprep.subr.mxu0 0.0
    %625 = vmatpush1.msra.mxu0 0.0
    %626 = vmatprep.subr.mxu0 0.0
    %627 = vmatpush1.msra.mxu0 0.0
    %628 = vmatprep.subr.mxu0 0.0
    %629 = vmatpush1.msra.mxu0 0.0
    %630 = vmatprep.subr.mxu0 0.0
    %631 = vmatpush1.msra.mxu0 0.0
    %632 = vmatprep.subr.mxu0 0.0
    %633 = vmatpush1.msra.mxu0 0.0
    %634 = vmatprep.subr.mxu0 0.0
    %635 = vmatpush1.msra.mxu0 0.0
    %636 = vmatprep.subr.mxu0 0.0
    %637 = vmatpush1.msra.mxu0 0.0
    %638 = vmatprep.subr.mxu0 0.0
    %639 = vmatpush1.msra.mxu0 0.0
    %640 = vmatprep.subr.mxu0 0.0
    %641 = vmatpush1.msra.mxu0 0.0
    %642 = vmatprep.mubr.f32.mxu0 0.0
    %643 = vmatmul.mubr.f32.gmra.mrb[0].mxu0 %v576
    %v644 = vpop.f32.mrb[0].mxu0
    %v645 = vadd.f32 %v120, %v644
    %v646 = vpop.f32.mrb[0].mxu0
    %647 = vdwg.mxu0
    %s648 = scalar_lea.vmem [#allocation6], 16
    %v649 = vld [vmem:[%s648] sm:$0xff]
    %v650 = vadd.f32 %v645, %v649
    %651 = vmatprep.subr.mxu0 0.0
    %652 = vmatpush1.msra.mxu0 %v80
    %653 = vmatprep.subr.mxu0 0.0
    %654 = vmatpush1.msra.mxu0 %v81
    %655 = vmatprep.subr.mxu0 0.0
    %656 = vmatpush1.msra.mxu0 %v82
    %657 = vmatprep.subr.mxu0 0.0
    %658 = vmatpush1.msra.mxu0 %v83
    %659 = vmatprep.subr.mxu0 0.0
    %660 = vmatpush1.msra.mxu0 %v84
    %661 = vmatprep.subr.mxu0 0.0
    %662 = vmatpush1.msra.mxu0 %v85
    %663 = vmatprep.subr.mxu0 0.0
    %664 = vmatpush1.msra.mxu0 %v86
    %665 = vmatprep.subr.mxu0 0.0
    %666 = vmatpush1.msra.mxu0 %v87
    %667 = vmatprep.subr.mxu0 0.0
    %668 = vmatpush1.msra.mxu0 %v88
    %669 = vmatprep.subr.mxu0 0.0
    %670 = vmatpush1.msra.mxu0 %v89
    %671 = vmatprep.subr.mxu0 0.0
    %672 = vmatpush1.msra.mxu0 %v90
    %673 = vmatprep.subr.mxu0 0.0
    %674 = vmatpush1.msra.mxu0 %v91
    %675 = vmatprep.subr.mxu0 0.0
    %676 = vmatpush1.msra.mxu0 %v92
    %677 = vmatprep.subr.mxu0 0.0
    %678 = vmatpush1.msra.mxu0 %v93
    %679 = vmatprep.subr.mxu0 0.0
    %680 = vmatpush1.msra.mxu0 %v94
    %681 = vmatprep.subr.mxu0 0.0
    %682 = vmatpush1.msra.mxu0 %v95
    %683 = vmatprep.subr.mxu0 0.0
    %684 = vmatpush1.msra.mxu0 0.0
    %685 = vmatprep.subr.mxu0 0.0
    %686 = vmatpush1.msra.mxu0 0.0
    %687 = vmatprep.subr.mxu0 0.0
    %688 = vmatpush1.msra.mxu0 0.0
    %689 = vmatprep.subr.mxu0 0.0
    %690 = vmatpush1.msra.mxu0 0.0
    %691 = vmatprep.subr.mxu0 0.0
    %692 = vmatpush1.msra.mxu0 0.0
    %693 = vmatprep.subr.mxu0 0.0
    %694 = vmatpush1.msra.mxu0 0.0
    %695 = vmatprep.subr.mxu0 0.0
    %696 = vmatpush1.msra.mxu0 0.0
    %697 = vmatprep.subr.mxu0 0.0
    %698 = vmatpush1.msra.mxu0 0.0
    %699 = vmatprep.subr.mxu0 0.0
    %700 = vmatpush1.msra.mxu0 0.0
    %701 = vmatprep.subr.mxu0 0.0
    %702 = vmatpush1.msra.mxu0 0.0
    %703 = vmatprep.subr.mxu0 0.0
    %704 = vmatpush1.msra.mxu0 0.0
    %705 = vmatprep.subr.mxu0 0.0
    %706 = vmatpush1.msra.mxu0 0.0
    %707 = vmatprep.subr.mxu0 0.0
    %708 = vmatpush1.msra.mxu0 0.0
    %709 = vmatprep.subr.mxu0 0.0
    %710 = vmatpush1.msra.mxu0 0.0
    %711 = vmatprep.subr.mxu0 0.0
    %712 = vmatpush1.msra.mxu0 0.0
    %713 = vmatprep.subr.mxu0 0.0
    %714 = vmatpush1.msra.mxu0 0.0
    %715 = vmatprep.mubr.f32.mxu0 0.0
    %716 = vmatmul.mubr.f32.gmra.mrb[0].mxu0 %v498
    %v717 = vpop.f32.mrb[0].mxu0
    %v718 = vadd.f32 0.0, %v717
    %v719 = vpop.f32.mrb[0].mxu0
    %720 = vdwg.mxu0
    %v721 = vadd.f32 %v650, %v718
    %v722 = vmax.f32 %v721, 0.0
    %s723 = scalar_lea.vmem [#allocation9], 16
    %724 = vst [vmem:[%s723] sm:$0xff] %v722
    %725 = vmatprep.subr.mxu0 0.0
    %726 = vmatpush1.msra.mxu0 %v96
    %727 = vmatprep.subr.mxu0 0.0
    %728 = vmatpush1.msra.mxu0 %v97
    %729 = vmatprep.subr.mxu0 0.0
    %730 = vmatpush1.msra.mxu0 %v98
    %731 = vmatprep.subr.mxu0 0.0
    %732 = vmatpush1.msra.mxu0 %v99
    %733 = vmatprep.subr.mxu0 0.0
    %734 = vmatpush1.msra.mxu0 %v100
    %735 = vmatprep.subr.mxu0 0.0
    %736 = vmatpush1.msra.mxu0 %v101
    %737 = vmatprep.subr.mxu0 0.0
    %738 = vmatpush1.msra.mxu0 %v102
    %739 = vmatprep.subr.mxu0 0.0
    %740 = vmatpush1.msra.mxu0 %v103
    %741 = vmatprep.subr.mxu0 0.0
    %742 = vmatpush1.msra.mxu0 %v104
    %743 = vmatprep.subr.mxu0 0.0
    %744 = vmatpush1.msra.mxu0 %v105
    %745 = vmatprep.subr.mxu0 0.0
    %746 = vmatpush1.msra.mxu0 %v106
    %747 = vmatprep.subr.mxu0 0.0
    %748 = vmatpush1.msra.mxu0 %v107
    %749 = vmatprep.subr.mxu0 0.0
    %750 = vmatpush1.msra.mxu0 %v108
    %751 = vmatprep.subr.mxu0 0.0
    %752 = vmatpush1.msra.mxu0 %v109
    %753 = vmatprep.subr.mxu0 0.0
    %754 = vmatpush1.msra.mxu0 %v110
    %755 = vmatprep.subr.mxu0 0.0
    %756 = vmatpush1.msra.mxu0 %v111
    %757 = vmatprep.subr.mxu0 0.0
    %758 = vmatpush1.msra.mxu0 0.0
    %759 = vmatprep.subr.mxu0 0.0
    %760 = vmatpush1.msra.mxu0 0.0
    %761 = vmatprep.subr.mxu0 0.0
    %762 = vmatpush1.msra.mxu0 0.0
    %763 = vmatprep.subr.mxu0 0.0
    %764 = vmatpush1.msra.mxu0 0.0
    %765 = vmatprep.subr.mxu0 0.0
    %766 = vmatpush1.msra.mxu0 0.0
    %767 = vmatprep.subr.mxu0 0.0
    %768 = vmatpush1.msra.mxu0 0.0
    %769 = vmatprep.subr.mxu0 0.0
    %770 = vmatpush1.msra.mxu0 0.0
    %771 = vmatprep.subr.mxu0 0.0
    %772 = vmatpush1.msra.mxu0 0.0
    %773 = vmatprep.subr.mxu0 0.0
    %774 = vmatpush1.msra.mxu0 0.0
    %775 = vmatprep.subr.mxu0 0.0
    %776 = vmatpush1.msra.mxu0 0.0
    %777 = vmatprep.subr.mxu0 0.0
    %778 = vmatpush1.msra.mxu0 0.0
    %779 = vmatprep.subr.mxu0 0.0
    %780 = vmatpush1.msra.mxu0 0.0
    %781 = vmatprep.subr.mxu0 0.0
    %782 = vmatpush1.msra.mxu0 0.0
    %783 = vmatprep.subr.mxu0 0.0
    %784 = vmatpush1.msra.mxu0 0.0
    %785 = vmatprep.subr.mxu0 0.0
    %786 = vmatpush1.msra.mxu0 0.0
    %787 = vmatprep.subr.mxu0 0.0
    %788 = vmatpush1.msra.mxu0 0.0
    %789 = vmatprep.mubr.f32.mxu0 0.0
    %790 = vmatmul.mubr.f32.gmra.mrb[0].mxu0 %v722
    %v791 = vpop.f32.mrb[0].mxu0
    %v792 = vadd.f32 %v275, %v791
    %v793 = vpop.f32.mrb[0].mxu0
    %794 = vdwg.mxu0
    %s795 = scalar_lea.vmem [#allocation10], 16
    %796 = vst.msk [vmem:[%s795] sm:$0xff] %vm347, %v792
    %s797 = scalar_lea.vmem [#allocation3], 24
    %v798 = vld [vmem:[%s797] sm:$0xff]
    %v800 = vsel %vm122, %v798, 0
    %802 = vmatprep.subr.mxu0 0.0
    %803 = vmatpush1.msra.mxu0 %v78
    %804 = vmatprep.subr.mxu0 0.0
    %805 = vmatpush1.msra.mxu0 %v79
    %806 = vmatprep.subr.mxu0 0.0
    %807 = vmatpush1.msra.mxu0 0.0
    %808 = vmatprep.subr.mxu0 0.0
    %809 = vmatpush1.msra.mxu0 0.0
    %810 = vmatprep.subr.mxu0 0.0
    %811 = vmatpush1.msra.mxu0 0.0
    %812 = vmatprep.subr.mxu0 0.0
    %813 = vmatpush1.msra.mxu0 0.0
    %814 = vmatprep.subr.mxu0 0.0
    %815 = vmatpush1.msra.mxu0 0.0
    %816 = vmatprep.subr.mxu0 0.0
    %817 = vmatpush1.msra.mxu0 0.0
    %818 = vmatprep.subr.mxu0 0.0
    %819 = vmatpush1.msra.mxu0 0.0
    %820 = vmatprep.subr.mxu0 0.0
    %821 = vmatpush1.msra.mxu0 0.0
    %822 = vmatprep.subr.mxu0 0.0
    %823 = vmatpush1.msra.mxu0 0.0
    %824 = vmatprep.subr.mxu0 0.0
    %825 = vmatpush1.msra.mxu0 0.0
    %826 = vmatprep.subr.mxu0 0.0
    %827 = vmatpush1.msra.mxu0 0.0
    %828 = vmatprep.subr.mxu0 0.0
    %829 = vmatpush1.msra.mxu0 0.0
    %830 = vmatprep.subr.mxu0 0.0
    %831 = vmatpush1.msra.mxu0 0.0
    %832 = vmatprep.subr.mxu0 0.0
    %833 = vmatpush1.msra.mxu0 0.0
    %834 = vmatprep.subr.mxu0 0.0
    %835 = vmatpush1.msra.mxu0 0.0
    %836 = vmatprep.subr.mxu0 0.0
    %837 = vmatpush1.msra.mxu0 0.0
    %838 = vmatprep.subr.mxu0 0.0
    %839 = vmatpush1.msra.mxu0 0.0
    %840 = vmatprep.subr.mxu0 0.0
    %841 = vmatpush1.msra.mxu0 0.0
    %842 = vmatprep.subr.mxu0 0.0
    %843 = vmatpush1.msra.mxu0 0.0
    %844 = vmatprep.subr.mxu0 0.0
    %845 = vmatpush1.msra.mxu0 0.0
    %846 = vmatprep.subr.mxu0 0.0
    %847 = vmatpush1.msra.mxu0 0.0
    %848 = vmatprep.subr.mxu0 0.0
    %849 = vmatpush1.msra.mxu0 0.0
    %850 = vmatprep.subr.mxu0 0.0
    %851 = vmatpush1.msra.mxu0 0.0
    %852 = vmatprep.subr.mxu0 0.0
    %853 = vmatpush1.msra.mxu0 0.0
    %854 = vmatprep.subr.mxu0 0.0
    %855 = vmatpush1.msra.mxu0 0.0
    %856 = vmatprep.subr.mxu0 0.0
    %857 = vmatpush1.msra.mxu0 0.0
    %858 = vmatprep.subr.mxu0 0.0
    %859 = vmatpush1.msra.mxu0 0.0
    %860 = vmatprep.subr.mxu0 0.0
    %861 = vmatpush1.msra.mxu0 0.0
    %862 = vmatprep.subr.mxu0 0.0
    %863 = vmatpush1.msra.mxu0 0.0
    %864 = vmatprep.subr.mxu0 0.0
    %865 = vmatpush1.msra.mxu0 0.0
    %866 = vmatprep.mubr.f32.mxu0 0.0
    %867 = vmatmul.mubr.f32.gmra.mrb[0].mxu0 %v800
    %v868 = vpop.f32.mrb[0].mxu0
    %v869 = vadd.f32 %v120, %v868
    %v870 = vpop.f32.mrb[0].mxu0
    %871 = vdwg.mxu0
    %s872 = scalar_lea.vmem [#allocation6], 24
    %v873 = vld [vmem:[%s872] sm:$0xff]
    %v874 = vadd.f32 %v869, %v873
    %875 = vmatprep.subr.mxu0 0.0
    %876 = vmatpush1.msra.mxu0 %v80
    %877 = vmatprep.subr.mxu0 0.0
    %878 = vmatpush1.msra.mxu0 %v81
    %879 = vmatprep.subr.mxu0 0.0
    %880 = vmatpush1.msra.mxu0 %v82
    %881 = vmatprep.subr.mxu0 0.0
    %882 = vmatpush1.msra.mxu0 %v83
    %883 = vmatprep.subr.mxu0 0.0
    %884 = vmatpush1.msra.mxu0 %v84
    %885 = vmatprep.subr.mxu0 0.0
    %886 = vmatpush1.msra.mxu0 %v85
    %887 = vmatprep.subr.mxu0 0.0
    %888 = vmatpush1.msra.mxu0 %v86
    %889 = vmatprep.subr.mxu0 0.0
    %890 = vmatpush1.msra.mxu0 %v87
    %891 = vmatprep.subr.mxu0 0.0
    %892 = vmatpush1.msra.mxu0 %v88
    %893 = vmatprep.subr.mxu0 0.0
    %894 = vmatpush1.msra.mxu0 %v89
    %895 = vmatprep.subr.mxu0 0.0
    %896 = vmatpush1.msra.mxu0 %v90
    %897 = vmatprep.subr.mxu0 0.0
    %898 = vmatpush1.msra.mxu0 %v91
    %899 = vmatprep.subr.mxu0 0.0
    %900 = vmatpush1.msra.mxu0 %v92
    %901 = vmatprep.subr.mxu0 0.0
    %902 = vmatpush1.msra.mxu0 %v93
    %903 = vmatprep.subr.mxu0 0.0
    %904 = vmatpush1.msra.mxu0 %v94
    %905 = vmatprep.subr.mxu0 0.0
    %906 = vmatpush1.msra.mxu0 %v95
    %907 = vmatprep.subr.mxu0 0.0
    %908 = vmatpush1.msra.mxu0 0.0
    %909 = vmatprep.subr.mxu0 0.0
    %910 = vmatpush1.msra.mxu0 0.0
    %911 = vmatprep.subr.mxu0 0.0
    %912 = vmatpush1.msra.mxu0 0.0
    %913 = vmatprep.subr.mxu0 0.0
    %914 = vmatpush1.msra.mxu0 0.0
    %915 = vmatprep.subr.mxu0 0.0
    %916 = vmatpush1.msra.mxu0 0.0
    %917 = vmatprep.subr.mxu0 0.0
    %918 = vmatpush1.msra.mxu0 0.0
    %919 = vmatprep.subr.mxu0 0.0
    %920 = vmatpush1.msra.mxu0 0.0
    %921 = vmatprep.subr.mxu0 0.0
    %922 = vmatpush1.msra.mxu0 0.0
    %923 = vmatprep.subr.mxu0 0.0
    %924 = vmatpush1.msra.mxu0 0.0
    %925 = vmatprep.subr.mxu0 0.0
    %926 = vmatpush1.msra.mxu0 0.0
    %927 = vmatprep.subr.mxu0 0.0
    %928 = vmatpush1.msra.mxu0 0.0
    %929 = vmatprep.subr.mxu0 0.0
    %930 = vmatpush1.msra.mxu0 0.0
    %931 = vmatprep.subr.mxu0 0.0
    %932 = vmatpush1.msra.mxu0 0.0
    %933 = vmatprep.subr.mxu0 0.0
    %934 = vmatpush1.msra.mxu0 0.0
    %935 = vmatprep.subr.mxu0 0.0
    %936 = vmatpush1.msra.mxu0 0.0
    %937 = vmatprep.subr.mxu0 0.0
    %938 = vmatpush1.msra.mxu0 0.0
    %939 = vmatprep.mubr.f32.mxu0 0.0
    %940 = vmatmul.mubr.f32.gmra.mrb[0].mxu0 %v722
    %v941 = vpop.f32.mrb[0].mxu0
    %v942 = vadd.f32 0.0, %v941
    %v943 = vpop.f32.mrb[0].mxu0
    %944 = vdwg.mxu0
    %v945 = vadd.f32 %v874, %v942
    %v946 = vmax.f32 %v945, 0.0
    %s947 = scalar_lea.vmem [#allocation9], 24
    %948 = vst [vmem:[%s947] sm:$0xff] %v946
    %949 = vmatprep.subr.mxu0 0.0
    %950 = vmatpush1.msra.mxu0 %v96
    %951 = vmatprep.subr.mxu0 0.0
    %952 = vmatpush1.msra.mxu0 %v97
    %953 = vmatprep.subr.mxu0 0.0
    %954 = vmatpush1.msra.mxu0 %v98
    %955 = vmatprep.subr.mxu0 0.0
    %956 = vmatpush1.msra.mxu0 %v99
    %957 = vmatprep.subr.mxu0 0.0
    %958 = vmatpush1.msra.mxu0 %v100
    %959 = vmatprep.subr.mxu0 0.0
    %960 = vmatpush1.msra.mxu0 %v101
    %961 = vmatprep.subr.mxu0 0.0
    %962 = vmatpush1.msra.mxu0 %v102
    %963 = vmatprep.subr.mxu0 0.0
    %964 = vmatpush1.msra.mxu0 %v103
    %965 = vmatprep.subr.mxu0 0.0
    %966 = vmatpush1.msra.mxu0 %v104
    %967 = vmatprep.subr.mxu0 0.0
    %968 = vmatpush1.msra.mxu0 %v105
    %969 = vmatprep.subr.mxu0 0.0
    %970 = vmatpush1.msra.mxu0 %v106
    %971 = vmatprep.subr.mxu0 0.0
    %972 = vmatpush1.msra.mxu0 %v107
    %973 = vmatprep.subr.mxu0 0.0
    %974 = vmatpush1.msra.mxu0 %v108
    %975 = vmatprep.subr.mxu0 0.0
    %976 = vmatpush1.msra.mxu0 %v109
    %977 = vmatprep.subr.mxu0 0.0
    %978 = vmatpush1.msra.mxu0 %v110
    %979 = vmatprep.subr.mxu0 0.0
    %980 = vmatpush1.msra.mxu0 %v111
    %981 = vmatprep.subr.mxu0 0.0
    %982 = vmatpush1.msra.mxu0 0.0
    %983 = vmatprep.subr.mxu0 0.0
    %984 = vmatpush1.msra.mxu0 0.0
    %985 = vmatprep.subr.mxu0 0.0
    %986 = vmatpush1.msra.mxu0 0.0
    %987 = vmatprep.subr.mxu0 0.0
    %988 = vmatpush1.msra.mxu0 0.0
    %989 = vmatprep.subr.mxu0 0.0
    %990 = vmatpush1.msra.mxu0 0.0
    %991 = vmatprep.subr.mxu0 0.0
    %992 = vmatpush1.msra.mxu0 0.0
    %993 = vmatprep.subr.mxu0 0.0
    %994 = vmatpush1.msra.mxu0 0.0
    %995 = vmatprep.subr.mxu0 0.0
    %996 = vmatpush1.msra.mxu0 0.0
    %997 = vmatprep.subr.mxu0 0.0
    %998 = vmatpush1.msra.mxu0 0.0
    %999 = vmatprep.subr.mxu0 0.0
    %1000 = vmatpush1.msra.mxu0 0.0
    %1001 = vmatprep.subr.mxu0 0.0
    %1002 = vmatpush1.msra.mxu0 0.0
    %1003 = vmatprep.subr.mxu0 0.0
    %1004 = vmatpush1.msra.mxu0 0.0
    %1005 = vmatprep.subr.mxu0 0.0
    %1006 = vmatpush1.msra.mxu0 0.0
    %1007 = vmatprep.subr.mxu0 0.0
    %1008 = vmatpush1.msra.mxu0 0.0
    %1009 = vmatprep.subr.mxu0 0.0
    %1010 = vmatpush1.msra.mxu0 0.0
    %1011 = vmatprep.subr.mxu0 0.0
    %1012 = vmatpush1.msra.mxu0 0.0
    %1013 = vmatprep.mubr.f32.mxu0 0.0
    %1014 = vmatmul.mubr.f32.gmra.mrb[0].mxu0 %v946
    %v1015 = vpop.f32.mrb[0].mxu0
    %v1016 = vadd.f32 %v275, %v1015
    %v1017 = vpop.f32.mrb[0].mxu0
    %1018 = vdwg.mxu0
    %s1019 = scalar_lea.vmem [#allocation10], 24
    %1020 = vst.msk [vmem:[%s1019] sm:$0xff] %vm347, %v1016
    %s1021 = scalar_lea.vmem [#allocation3], 32
    %v1022 = vld [vmem:[%s1021] sm:$0xff]
    %v1024 = vsel %vm122, %v1022, 0
    %1026 = vmatprep.subr.mxu0 0.0
    %1027 = vmatpush1.msra.mxu0 %v78
    %1028 = vmatprep.subr.mxu0 0.0
    %1029 = vmatpush1.msra.mxu0 %v79
    %1030 = vmatprep.subr.mxu0 0.0
    %1031 = vmatpush1.msra.mxu0 0.0
    %1032 = vmatprep.subr.mxu0 0.0
    %1033 = vmatpush1.msra.mxu0 0.0
    %1034 = vmatprep.subr.mxu0 0.0
    %1035 = vmatpush1.msra.mxu0 0.0
    %1036 = vmatprep.subr.mxu0 0.0
    %1037 = vmatpush1.msra.mxu0 0.0
    %1038 = vmatprep.subr.mxu0 0.0
    %1039 = vmatpush1.msra.mxu0 0.0
    %1040 = vmatprep.subr.mxu0 0.0
    %1041 = vmatpush1.msra.mxu0 0.0
    %1042 = vmatprep.subr.mxu0 0.0
    %1043 = vmatpush1.msra.mxu0 0.0
    %1044 = vmatprep.subr.mxu0 0.0
    %1045 = vmatpush1.msra.mxu0 0.0
    %1046 = vmatprep.subr.mxu0 0.0
    %1047 = vmatpush1.msra.mxu0 0.0
    %1048 = vmatprep.subr.mxu0 0.0
    %1049 = vmatpush1.msra.mxu0 0.0
    %1050 = vmatprep.subr.mxu0 0.0
    %1051 = vmatpush1.msra.mxu0 0.0
    %1052 = vmatprep.subr.mxu0 0.0
    %1053 = vmatpush1.msra.mxu0 0.0
    %1054 = vmatprep.subr.mxu0 0.0
    %1055 = vmatpush1.msra.mxu0 0.0
    %1056 = vmatprep.subr.mxu0 0.0
    %1057 = vmatpush1.msra.mxu0 0.0
    %1058 = vmatprep.subr.mxu0 0.0
    %1059 = vmatpush1.msra.mxu0 0.0
    %1060 = vmatprep.subr.mxu0 0.0
    %1061 = vmatpush1.msra.mxu0 0.0
    %1062 = vmatprep.subr.mxu0 0.0
    %1063 = vmatpush1.msra.mxu0 0.0
    %1064 = vmatprep.subr.mxu0 0.0
    %1065 = vmatpush1.msra.mxu0 0.0
    %1066 = vmatprep.subr.mxu0 0.0
    %1067 = vmatpush1.msra.mxu0 0.0
    %1068 = vmatprep.subr.mxu0 0.0
    %1069 = vmatpush1.msra.mxu0 0.0
    %1070 = vmatprep.subr.mxu0 0.0
    %1071 = vmatpush1.msra.mxu0 0.0
    %1072 = vmatprep.subr.mxu0 0.0
    %1073 = vmatpush1.msra.mxu0 0.0
    %1074 = vmatprep.subr.mxu0 0.0
    %1075 = vmatpush1.msra.mxu0 0.0
    %1076 = vmatprep.subr.mxu0 0.0
    %1077 = vmatpush1.msra.mxu0 0.0
    %1078 = vmatprep.subr.mxu0 0.0
    %1079 = vmatpush1.msra.mxu0 0.0
    %1080 = vmatprep.subr.mxu0 0.0
    %1081 = vmatpush1.msra.mxu0 0.0
    %1082 = vmatprep.subr.mxu0 0.0
    %1083 = vmatpush1.msra.mxu0 0.0
    %1084 = vmatprep.subr.mxu0 0.0
    %1085 = vmatpush1.msra.mxu0 0.0
    %1086 = vmatprep.subr.mxu0 0.0
    %1087 = vmatpush1.msra.mxu0 0.0
    %1088 = vmatprep.subr.mxu0 0.0
    %1089 = vmatpush1.msra.mxu0 0.0
    %1090 = vmatprep.mubr.f32.mxu0 0.0
    %1091 = vmatmul.mubr.f32.gmra.mrb[0].mxu0 %v1024
    %v1092 = vpop.f32.mrb[0].mxu0
    %v1093 = vadd.f32 %v120, %v1092
    %v1094 = vpop.f32.mrb[0].mxu0
    %1095 = vdwg.mxu0
    %s1096 = scalar_lea.vmem [#allocation6], 32
    %v1097 = vld [vmem:[%s1096] sm:$0xff]
    %v1098 = vadd.f32 %v1093, %v1097
    %1099 = vmatprep.subr.mxu0 0.0
    %1100 = vmatpush1.msra.mxu0 %v80
    %1101 = vmatprep.subr.mxu0 0.0
    %1102 = vmatpush1.msra.mxu0 %v81
    %1103 = vmatprep.subr.mxu0 0.0
    %1104 = vmatpush1.msra.mxu0 %v82
    %1105 = vmatprep.subr.mxu0 0.0
    %1106 = vmatpush1.msra.mxu0 %v83
    %1107 = vmatprep.subr.mxu0 0.0
    %1108 = vmatpush1.msra.mxu0 %v84
    %1109 = vmatprep.subr.mxu0 0.0
    %1110 = vmatpush1.msra.mxu0 %v85
    %1111 = vmatprep.subr.mxu0 0.0
    %1112 = vmatpush1.msra.mxu0 %v86
    %1113 = vmatprep.subr.mxu0 0.0
    %1114 = vmatpush1.msra.mxu0 %v87
    %1115 = vmatprep.subr.mxu0 0.0
    %1116 = vmatpush1.msra.mxu0 %v88
    %1117 = vmatprep.subr.mxu0 0.0
    %1118 = vmatpush1.msra.mxu0 %v89
    %1119 = vmatprep.subr.mxu0 0.0
    %1120 = vmatpush1.msra.mxu0 %v90
    %1121 = vmatprep.subr.mxu0 0.0
    %1122 = vmatpush1.msra.mxu0 %v91
    %1123 = vmatprep.subr.mxu0 0.0
    %1124 = vmatpush1.msra.mxu0 %v92
    %1125 = vmatprep.subr.mxu0 0.0
    %1126 = vmatpush1.msra.mxu0 %v93
    %1127 = vmatprep.subr.mxu0 0.0
    %1128 = vmatpush1.msra.mxu0 %v94
    %1129 = vmatprep.subr.mxu0 0.0
    %1130 = vmatpush1.msra.mxu0 %v95
    %1131 = vmatprep.subr.mxu0 0.0
    %1132 = vmatpush1.msra.mxu0 0.0
    %1133 = vmatprep.subr.mxu0 0.0
    %1134 = vmatpush1.msra.mxu0 0.0
    %1135 = vmatprep.subr.mxu0 0.0
    %1136 = vmatpush1.msra.mxu0 0.0
    %1137 = vmatprep.subr.mxu0 0.0
    %1138 = vmatpush1.msra.mxu0 0.0
    %1139 = vmatprep.subr.mxu0 0.0
    %1140 = vmatpush1.msra.mxu0 0.0
    %1141 = vmatprep.subr.mxu0 0.0
    %1142 = vmatpush1.msra.mxu0 0.0
    %1143 = vmatprep.subr.mxu0 0.0
    %1144 = vmatpush1.msra.mxu0 0.0
    %1145 = vmatprep.subr.mxu0 0.0
    %1146 = vmatpush1.msra.mxu0 0.0
    %1147 = vmatprep.subr.mxu0 0.0
    %1148 = vmatpush1.msra.mxu0 0.0
    %1149 = vmatprep.subr.mxu0 0.0
    %1150 = vmatpush1.msra.mxu0 0.0
    %1151 = vmatprep.subr.mxu0 0.0
    %1152 = vmatpush1.msra.mxu0 0.0
    %1153 = vmatprep.subr.mxu0 0.0
    %1154 = vmatpush1.msra.mxu0 0.0
    %1155 = vmatprep.subr.mxu0 0.0
    %1156 = vmatpush1.msra.mxu0 0.0
    %1157 = vmatprep.subr.mxu0 0.0
    %1158 = vmatpush1.msra.mxu0 0.0
    %1159 = vmatprep.subr.mxu0 0.0
    %1160 = vmatpush1.msra.mxu0 0.0
    %1161 = vmatprep.subr.mxu0 0.0
    %1162 = vmatpush1.msra.mxu0 0.0
    %1163 = vmatprep.mubr.f32.mxu0 0.0
    %1164 = vmatmul.mubr.f32.gmra.mrb[0].mxu0 %v946
    %v1165 = vpop.f32.mrb[0].mxu0
    %v1166 = vadd.f32 0.0, %v1165
    %v1167 = vpop.f32.mrb[0].mxu0
    %1168 = vdwg.mxu0
    %v1169 = vadd.f32 %v1098, %v1166
    %v1170 = vmax.f32 %v1169, 0.0
    %s1171 = scalar_lea.vmem [#allocation9], 32
    %1172 = vst [vmem:[%s1171] sm:$0xff] %v1170
    %1173 = vmatprep.subr.mxu0 0.0
    %1174 = vmatpush1.msra.mxu0 %v96
    %1175 = vmatprep.subr.mxu0 0.0
    %1176 = vmatpush1.msra.mxu0 %v97
    %1177 = vmatprep.subr.mxu0 0.0
    %1178 = vmatpush1.msra.mxu0 %v98
    %1179 = vmatprep.subr.mxu0 0.0
    %1180 = vmatpush1.msra.mxu0 %v99
    %1181 = vmatprep.subr.mxu0 0.0
    %1182 = vmatpush1.msra.mxu0 %v100
    %1183 = vmatprep.subr.mxu0 0.0
    %1184 = vmatpush1.msra.mxu0 %v101
    %1185 = vmatprep.subr.mxu0 0.0
    %1186 = vmatpush1.msra.mxu0 %v102
    %1187 = vmatprep.subr.mxu0 0.0
    %1188 = vmatpush1.msra.mxu0 %v103
    %1189 = vmatprep.subr.mxu0 0.0
    %1190 = vmatpush1.msra.mxu0 %v104
    %1191 = vmatprep.subr.mxu0 0.0
    %1192 = vmatpush1.msra.mxu0 %v105
    %1193 = vmatprep.subr.mxu0 0.0
    %1194 = vmatpush1.msra.mxu0 %v106
    %1195 = vmatprep.subr.mxu0 0.0
    %1196 = vmatpush1.msra.mxu0 %v107
    %1197 = vmatprep.subr.mxu0 0.0
    %1198 = vmatpush1.msra.mxu0 %v108
    %1199 = vmatprep.subr.mxu0 0.0
    %1200 = vmatpush1.msra.mxu0 %v109
    %1201 = vmatprep.subr.mxu0 0.0
    %1202 = vmatpush1.msra.mxu0 %v110
    %1203 = vmatprep.subr.mxu0 0.0
    %1204 = vmatpush1.msra.mxu0 %v111
    %1205 = vmatprep.subr.mxu0 0.0
    %1206 = vmatpush1.msra.mxu0 0.0
    %1207 = vmatprep.subr.mxu0 0.0
    %1208 = vmatpush1.msra.mxu0 0.0
    %1209 = vmatprep.subr.mxu0 0.0
    %1210 = vmatpush1.msra.mxu0 0.0
    %1211 = vmatprep.subr.mxu0 0.0
    %1212 = vmatpush1.msra.mxu0 0.0
    %1213 = vmatprep.subr.mxu0 0.0
    %1214 = vmatpush1.msra.mxu0 0.0
    %1215 = vmatprep.subr.mxu0 0.0
    %1216 = vmatpush1.msra.mxu0 0.0
    %1217 = vmatprep.subr.mxu0 0.0
    %1218 = vmatpush1.msra.mxu0 0.0
    %1219 = vmatprep.subr.mxu0 0.0
    %1220 = vmatpush1.msra.mxu0 0.0
    %1221 = vmatprep.subr.mxu0 0.0
    %1222 = vmatpush1.msra.mxu0 0.0
    %1223 = vmatprep.subr.mxu0 0.0
    %1224 = vmatpush1.msra.mxu0 0.0
    %1225 = vmatprep.subr.mxu0 0.0
    %1226 = vmatpush1.msra.mxu0 0.0
    %1227 = vmatprep.subr.mxu0 0.0
    %1228 = vmatpush1.msra.mxu0 0.0
    %1229 = vmatprep.subr.mxu0 0.0
    %1230 = vmatpush1.msra.mxu0 0.0
    %1231 = vmatprep.subr.mxu0 0.0
    %1232 = vmatpush1.msra.mxu0 0.0
    %1233 = vmatprep.subr.mxu0 0.0
    %1234 = vmatpush1.msra.mxu0 0.0
    %1235 = vmatprep.subr.mxu0 0.0
    %1236 = vmatpush1.msra.mxu0 0.0
    %1237 = vmatprep.mubr.f32.mxu0 0.0
    %1238 = vmatmul.mubr.f32.gmra.mrb[0].mxu0 %v1170
    %v1239 = vpop.f32.mrb[0].mxu0
    %v1240 = vadd.f32 %v275, %v1239
    %v1241 = vpop.f32.mrb[0].mxu0
    %1242 = vdwg.mxu0
    %s1243 = scalar_lea.vmem [#allocation10], 32
    %1244 = vst.msk [vmem:[%s1243] sm:$0xff] %vm347, %v1240
    %s1245 = scalar_lea.vmem [#allocation3], 40
    %v1246 = vld [vmem:[%s1245] sm:$0xff]
    %v1248 = vsel %vm122, %v1246, 0
    %1250 = vmatprep.subr.mxu0 0.0
    %1251 = vmatpush1.msra.mxu0 %v78
    %1252 = vmatprep.subr.mxu0 0.0
    %1253 = vmatpush1.msra.mxu0 %v79
    %1254 = vmatprep.subr.mxu0 0.0
    %1255 = vmatpush1.msra.mxu0 0.0
    %1256 = vmatprep.subr.mxu0 0.0
    %1257 = vmatpush1.msra.mxu0 0.0
    %1258 = vmatprep.subr.mxu0 0.0
    %1259 = vmatpush1.msra.mxu0 0.0
    %1260 = vmatprep.subr.mxu0 0.0
    %1261 = vmatpush1.msra.mxu0 0.0
    %1262 = vmatprep.subr.mxu0 0.0
    %1263 = vmatpush1.msra.mxu0 0.0
    %1264 = vmatprep.subr.mxu0 0.0
    %1265 = vmatpush1.msra.mxu0 0.0
    %1266 = vmatprep.subr.mxu0 0.0
    %1267 = vmatpush1.msra.mxu0 0.0
    %1268 = vmatprep.subr.mxu0 0.0
    %1269 = vmatpush1.msra.mxu0 0.0
    %1270 = vmatprep.subr.mxu0 0.0
    %1271 = vmatpush1.msra.mxu0 0.0
    %1272 = vmatprep.subr.mxu0 0.0
    %1273 = vmatpush1.msra.mxu0 0.0
    %1274 = vmatprep.subr.mxu0 0.0
    %1275 = vmatpush1.msra.mxu0 0.0
    %1276 = vmatprep.subr.mxu0 0.0
    %1277 = vmatpush1.msra.mxu0 0.0
    %1278 = vmatprep.subr.mxu0 0.0
    %1279 = vmatpush1.msra.mxu0 0.0
    %1280 = vmatprep.subr.mxu0 0.0
    %1281 = vmatpush1.msra.mxu0 0.0
    %1282 = vmatprep.subr.mxu0 0.0
    %1283 = vmatpush1.msra.mxu0 0.0
    %1284 = vmatprep.subr.mxu0 0.0
    %1285 = vmatpush1.msra.mxu0 0.0
    %1286 = vmatprep.subr.mxu0 0.0
    %1287 = vmatpush1.msra.mxu0 0.0
    %1288 = vmatprep.subr.mxu0 0.0
    %1289 = vmatpush1.msra.mxu0 0.0
    %1290 = vmatprep.subr.mxu0 0.0
    %1291 = vmatpush1.msra.mxu0 0.0
    %1292 = vmatprep.subr.mxu0 0.0
    %1293 = vmatpush1.msra.mxu0 0.0
    %1294 = vmatprep.subr.mxu0 0.0
    %1295 = vmatpush1.msra.mxu0 0.0
    %1296 = vmatprep.subr.mxu0 0.0
    %1297 = vmatpush1.msra.mxu0 0.0
    %1298 = vmatprep.subr.mxu0 0.0
    %1299 = vmatpush1.msra.mxu0 0.0
    %1300 = vmatprep.subr.mxu0 0.0
    %1301 = vmatpush1.msra.mxu0 0.0
    %1302 = vmatprep.subr.mxu0 0.0
    %1303 = vmatpush1.msra.mxu0 0.0
    %1304 = vmatprep.subr.mxu0 0.0
    %1305 = vmatpush1.msra.mxu0 0.0
    %1306 = vmatprep.subr.mxu0 0.0
    %1307 = vmatpush1.msra.mxu0 0.0
    %1308 = vmatprep.subr.mxu0 0.0
    %1309 = vmatpush1.msra.mxu0 0.0
    %1310 = vmatprep.subr.mxu0 0.0
    %1311 = vmatpush1.msra.mxu0 0.0
    %1312 = vmatprep.subr.mxu0 0.0
    %1313 = vmatpush1.msra.mxu0 0.0
    %1314 = vmatprep.mubr.f32.mxu0 0.0
    %1315 = vmatmul.mubr.f32.gmra.mrb[0].mxu0 %v1248
    %v1316 = vpop.f32.mrb[0].mxu0
    %v1317 = vadd.f32 %v120, %v1316
    %v1318 = vpop.f32.mrb[0].mxu0
    %1319 = vdwg.mxu0
    %s1320 = scalar_lea.vmem [#allocation6], 40
    %v1321 = vld [vmem:[%s1320] sm:$0xff]
    %v1322 = vadd.f32 %v1317, %v1321
    %1323 = vmatprep.subr.mxu0 0.0
    %1324 = vmatpush1.msra.mxu0 %v80
    %1325 = vmatprep.subr.mxu0 0.0
    %1326 = vmatpush1.msra.mxu0 %v81
    %1327 = vmatprep.subr.mxu0 0.0
    %1328 = vmatpush1.msra.mxu0 %v82
    %1329 = vmatprep.subr.mxu0 0.0
    %1330 = vmatpush1.msra.mxu0 %v83
    %1331 = vmatprep.subr.mxu0 0.0
    %1332 = vmatpush1.msra.mxu0 %v84
    %1333 = vmatprep.subr.mxu0 0.0
    %1334 = vmatpush1.msra.mxu0 %v85
    %1335 = vmatprep.subr.mxu0 0.0
    %1336 = vmatpush1.msra.mxu0 %v86
    %1337 = vmatprep.subr.mxu0 0.0
    %1338 = vmatpush1.msra.mxu0 %v87
    %1339 = vmatprep.subr.mxu0 0.0
    %1340 = vmatpush1.msra.mxu0 %v88
    %1341 = vmatprep.subr.mxu0 0.0
    %1342 = vmatpush1.msra.mxu0 %v89
    %1343 = vmatprep.subr.mxu0 0.0
    %1344 = vmatpush1.msra.mxu0 %v90
    %1345 = vmatprep.subr.mxu0 0.0
    %1346 = vmatpush1.msra.mxu0 %v91
    %1347 = vmatprep.subr.mxu0 0.0
    %1348 = vmatpush1.msra.mxu0 %v92
    %1349 = vmatprep.subr.mxu0 0.0
    %1350 = vmatpush1.msra.mxu0 %v93
    %1351 = vmatprep.subr.mxu0 0.0
    %1352 = vmatpush1.msra.mxu0 %v94
    %1353 = vmatprep.subr.mxu0 0.0
    %1354 = vmatpush1.msra.mxu0 %v95
    %1355 = vmatprep.subr.mxu0 0.0
    %1356 = vmatpush1.msra.mxu0 0.0
    %1357 = vmatprep.subr.mxu0 0.0
    %1358 = vmatpush1.msra.mxu0 0.0
    %1359 = vmatprep.subr.mxu0 0.0
    %1360 = vmatpush1.msra.mxu0 0.0
    %1361 = vmatprep.subr.mxu0 0.0
    %1362 = vmatpush1.msra.mxu0 0.0
    %1363 = vmatprep.subr.mxu0 0.0
    %1364 = vmatpush1.msra.mxu0 0.0
    %1365 = vmatprep.subr.mxu0 0.0
    %1366 = vmatpush1.msra.mxu0 0.0
    %1367 = vmatprep.subr.mxu0 0.0
    %1368 = vmatpush1.msra.mxu0 0.0
    %1369 = vmatprep.subr.mxu0 0.0
    %1370 = vmatpush1.msra.mxu0 0.0
    %1371 = vmatprep.subr.mxu0 0.0
    %1372 = vmatpush1.msra.mxu0 0.0
    %1373 = vmatprep.subr.mxu0 0.0
    %1374 = vmatpush1.msra.mxu0 0.0
    %1375 = vmatprep.subr.mxu0 0.0
    %1376 = vmatpush1.msra.mxu0 0.0
    %1377 = vmatprep.subr.mxu0 0.0
    %1378 = vmatpush1.msra.mxu0 0.0
    %1379 = vmatprep.subr.mxu0 0.0
    %1380 = vmatpush1.msra.mxu0 0.0
    %1381 = vmatprep.subr.mxu0 0.0
    %1382 = vmatpush1.msra.mxu0 0.0
    %1383 = vmatprep.subr.mxu0 0.0
    %1384 = vmatpush1.msra.mxu0 0.0
    %1385 = vmatprep.subr.mxu0 0.0
    %1386 = vmatpush1.msra.mxu0 0.0
    %1387 = vmatprep.mubr.f32.mxu0 0.0
    %1388 = vmatmul.mubr.f32.gmra.mrb[0].mxu0 %v1170
    %v1389 = vpop.f32.mrb[0].mxu0
    %v1390 = vadd.f32 0.0, %v1389
    %v1391 = vpop.f32.mrb[0].mxu0
    %1392 = vdwg.mxu0
    %v1393 = vadd.f32 %v1322, %v1390
    %v1394 = vmax.f32 %v1393, 0.0
    %s1395 = scalar_lea.vmem [#allocation9], 40
    %1396 = vst [vmem:[%s1395] sm:$0xff] %v1394
    %1397 = vmatprep.subr.mxu0 0.0
    %1398 = vmatpush1.msra.mxu0 %v96
    %1399 = vmatprep.subr.mxu0 0.0
    %1400 = vmatpush1.msra.mxu0 %v97
    %1401 = vmatprep.subr.mxu0 0.0
    %1402 = vmatpush1.msra.mxu0 %v98
    %1403 = vmatprep.subr.mxu0 0.0
    %1404 = vmatpush1.msra.mxu0 %v99
    %1405 = vmatprep.subr.mxu0 0.0
    %1406 = vmatpush1.msra.mxu0 %v100
    %1407 = vmatprep.subr.mxu0 0.0
    %1408 = vmatpush1.msra.mxu0 %v101
    %1409 = vmatprep.subr.mxu0 0.0
    %1410 = vmatpush1.msra.mxu0 %v102
    %1411 = vmatprep.subr.mxu0 0.0
    %1412 = vmatpush1.msra.mxu0 %v103
    %1413 = vmatprep.subr.mxu0 0.0
    %1414 = vmatpush1.msra.mxu0 %v104
    %1415 = vmatprep.subr.mxu0 0.0
    %1416 = vmatpush1.msra.mxu0 %v105
    %1417 = vmatprep.subr.mxu0 0.0
    %1418 = vmatpush1.msra.mxu0 %v106
    %1419 = vmatprep.subr.mxu0 0.0
    %1420 = vmatpush1.msra.mxu0 %v107
    %1421 = vmatprep.subr.mxu0 0.0
    %1422 = vmatpush1.msra.mxu0 %v108
    %1423 = vmatprep.subr.mxu0 0.0
    %1424 = vmatpush1.msra.mxu0 %v109
    %1425 = vmatprep.subr.mxu0 0.0
    %1426 = vmatpush1.msra.mxu0 %v110
    %1427 = vmatprep.subr.mxu0 0.0
    %1428 = vmatpush1.msra.mxu0 %v111
    %1429 = vmatprep.subr.mxu0 0.0
    %1430 = vmatpush1.msra.mxu0 0.0
    %1431 = vmatprep.subr.mxu0 0.0
    %1432 = vmatpush1.msra.mxu0 0.0
    %1433 = vmatprep.subr.mxu0 0.0
    %1434 = vmatpush1.msra.mxu0 0.0
    %1435 = vmatprep.subr.mxu0 0.0
    %1436 = vmatpush1.msra.mxu0 0.0
    %1437 = vmatprep.subr.mxu0 0.0
    %1438 = vmatpush1.msra.mxu0 0.0
    %1439 = vmatprep.subr.mxu0 0.0
    %1440 = vmatpush1.msra.mxu0 0.0
    %1441 = vmatprep.subr.mxu0 0.0
    %1442 = vmatpush1.msra.mxu0 0.0
    %1443 = vmatprep.subr.mxu0 0.0
    %1444 = vmatpush1.msra.mxu0 0.0
    %1445 = vmatprep.subr.mxu0 0.0
    %1446 = vmatpush1.msra.mxu0 0.0
    %1447 = vmatprep.subr.mxu0 0.0
    %1448 = vmatpush1.msra.mxu0 0.0
    %1449 = vmatprep.subr.mxu0 0.0
    %1450 = vmatpush1.msra.mxu0 0.0
    %1451 = vmatprep.subr.mxu0 0.0
    %1452 = vmatpush1.msra.mxu0 0.0
    %1453 = vmatprep.subr.mxu0 0.0
    %1454 = vmatpush1.msra.mxu0 0.0
    %1455 = vmatprep.subr.mxu0 0.0
    %1456 = vmatpush1.msra.mxu0 0.0
    %1457 = vmatprep.subr.mxu0 0.0
    %1458 = vmatpush1.msra.mxu0 0.0
    %1459 = vmatprep.subr.mxu0 0.0
    %1460 = vmatpush1.msra.mxu0 0.0
    %1461 = vmatprep.mubr.f32.mxu0 0.0
    %1462 = vmatmul.mubr.f32.gmra.mrb[0].mxu0 %v1394
    %v1463 = vpop.f32.mrb[0].mxu0
    %v1464 = vadd.f32 %v275, %v1463
    %v1465 = vpop.f32.mrb[0].mxu0
    %1466 = vdwg.mxu0
    %s1467 = scalar_lea.vmem [#allocation10], 40
    %1468 = vst.msk [vmem:[%s1467] sm:$0xff] %vm347, %v1464
    %s1469 = scalar_lea.vmem [#allocation3], 48
    %v1470 = vld [vmem:[%s1469] sm:$0xff]
    %v1472 = vsel %vm122, %v1470, 0
    %1474 = vmatprep.subr.mxu0 0.0
    %1475 = vmatpush1.msra.mxu0 %v78
    %1476 = vmatprep.subr.mxu0 0.0
    %1477 = vmatpush1.msra.mxu0 %v79
    %1478 = vmatprep.subr.mxu0 0.0
    %1479 = vmatpush1.msra.mxu0 0.0
    %1480 = vmatprep.subr.mxu0 0.0
    %1481 = vmatpush1.msra.mxu0 0.0
    %1482 = vmatprep.subr.mxu0 0.0
    %1483 = vmatpush1.msra.mxu0 0.0
    %1484 = vmatprep.subr.mxu0 0.0
    %1485 = vmatpush1.msra.mxu0 0.0
    %1486 = vmatprep.subr.mxu0 0.0
    %1487 = vmatpush1.msra.mxu0 0.0
    %1488 = vmatprep.subr.mxu0 0.0
    %1489 = vmatpush1.msra.mxu0 0.0
    %1490 = vmatprep.subr.mxu0 0.0
    %1491 = vmatpush1.msra.mxu0 0.0
    %1492 = vmatprep.subr.mxu0 0.0
    %1493 = vmatpush1.msra.mxu0 0.0
    %1494 = vmatprep.subr.mxu0 0.0
    %1495 = vmatpush1.msra.mxu0 0.0
    %1496 = vmatprep.subr.mxu0 0.0
    %1497 = vmatpush1.msra.mxu0 0.0
    %1498 = vmatprep.subr.mxu0 0.0
    %1499 = vmatpush1.msra.mxu0 0.0
    %1500 = vmatprep.subr.mxu0 0.0
    %1501 = vmatpush1.msra.mxu0 0.0
    %1502 = vmatprep.subr.mxu0 0.0
    %1503 = vmatpush1.msra.mxu0 0.0
    %1504 = vmatprep.subr.mxu0 0.0
    %1505 = vmatpush1.msra.mxu0 0.0
    %1506 = vmatprep.subr.mxu0 0.0
    %1507 = vmatpush1.msra.mxu0 0.0
    %1508 = vmatprep.subr.mxu0 0.0
    %1509 = vmatpush1.msra.mxu0 0.0
    %1510 = vmatprep.subr.mxu0 0.0
    %1511 = vmatpush1.msra.mxu0 0.0
    %1512 = vmatprep.subr.mxu0 0.0
    %1513 = vmatpush1.msra.mxu0 0.0
    %1514 = vmatprep.subr.mxu0 0.0
    %1515 = vmatpush1.msra.mxu0 0.0
    %1516 = vmatprep.subr.mxu0 0.0
    %1517 = vmatpush1.msra.mxu0 0.0
    %1518 = vmatprep.subr.mxu0 0.0
    %1519 = vmatpush1.msra.mxu0 0.0
    %1520 = vmatprep.subr.mxu0 0.0
    %1521 = vmatpush1.msra.mxu0 0.0
    %1522 = vmatprep.subr.mxu0 0.0
    %1523 = vmatpush1.msra.mxu0 0.0
    %1524 = vmatprep.subr.mxu0 0.0
    %1525 = vmatpush1.msra.mxu0 0.0
    %1526 = vmatprep.subr.mxu0 0.0
    %1527 = vmatpush1.msra.mxu0 0.0
    %1528 = vmatprep.subr.mxu0 0.0
    %1529 = vmatpush1.msra.mxu0 0.0
    %1530 = vmatprep.subr.mxu0 0.0
    %1531 = vmatpush1.msra.mxu0 0.0
    %1532 = vmatprep.subr.mxu0 0.0
    %1533 = vmatpush1.msra.mxu0 0.0
    %1534 = vmatprep.subr.mxu0 0.0
    %1535 = vmatpush1.msra.mxu0 0.0
    %1536 = vmatprep.subr.mxu0 0.0
    %1537 = vmatpush1.msra.mxu0 0.0
    %1538 = vmatprep.mubr.f32.mxu0 0.0
    %1539 = vmatmul.mubr.f32.gmra.mrb[0].mxu0 %v1472
    %v1540 = vpop.f32.mrb[0].mxu0
    %v1541 = vadd.f32 %v120, %v1540
    %v1542 = vpop.f32.mrb[0].mxu0
    %1543 = vdwg.mxu0
    %s1544 = scalar_lea.vmem [#allocation6], 48
    %v1545 = vld [vmem:[%s1544] sm:$0xff]
    %v1546 = vadd.f32 %v1541, %v1545
    %1547 = vmatprep.subr.mxu0 0.0
    %1548 = vmatpush1.msra.mxu0 %v80
    %1549 = vmatprep.subr.mxu0 0.0
    %1550 = vmatpush1.msra.mxu0 %v81
    %1551 = vmatprep.subr.mxu0 0.0
    %1552 = vmatpush1.msra.mxu0 %v82
    %1553 = vmatprep.subr.mxu0 0.0
    %1554 = vmatpush1.msra.mxu0 %v83
    %1555 = vmatprep.subr.mxu0 0.0
    %1556 = vmatpush1.msra.mxu0 %v84
    %1557 = vmatprep.subr.mxu0 0.0
    %1558 = vmatpush1.msra.mxu0 %v85
    %1559 = vmatprep.subr.mxu0 0.0
    %1560 = vmatpush1.msra.mxu0 %v86
    %1561 = vmatprep.subr.mxu0 0.0
    %1562 = vmatpush1.msra.mxu0 %v87
    %1563 = vmatprep.subr.mxu0 0.0
    %1564 = vmatpush1.msra.mxu0 %v88
    %1565 = vmatprep.subr.mxu0 0.0
    %1566 = vmatpush1.msra.mxu0 %v89
    %1567 = vmatprep.subr.mxu0 0.0
    %1568 = vmatpush1.msra.mxu0 %v90
    %1569 = vmatprep.subr.mxu0 0.0
    %1570 = vmatpush1.msra.mxu0 %v91
    %1571 = vmatprep.subr.mxu0 0.0
    %1572 = vmatpush1.msra.mxu0 %v92
    %1573 = vmatprep.subr.mxu0 0.0
    %1574 = vmatpush1.msra.mxu0 %v93
    %1575 = vmatprep.subr.mxu0 0.0
    %1576 = vmatpush1.msra.mxu0 %v94
    %1577 = vmatprep.subr.mxu0 0.0
    %1578 = vmatpush1.msra.mxu0 %v95
    %1579 = vmatprep.subr.mxu0 0.0
    %1580 = vmatpush1.msra.mxu0 0.0
    %1581 = vmatprep.subr.mxu0 0.0
    %1582 = vmatpush1.msra.mxu0 0.0
    %1583 = vmatprep.subr.mxu0 0.0
    %1584 = vmatpush1.msra.mxu0 0.0
    %1585 = vmatprep.subr.mxu0 0.0
    %1586 = vmatpush1.msra.mxu0 0.0
    %1587 = vmatprep.subr.mxu0 0.0
    %1588 = vmatpush1.msra.mxu0 0.0
    %1589 = vmatprep.subr.mxu0 0.0
    %1590 = vmatpush1.msra.mxu0 0.0
    %1591 = vmatprep.subr.mxu0 0.0
    %1592 = vmatpush1.msra.mxu0 0.0
    %1593 = vmatprep.subr.mxu0 0.0
    %1594 = vmatpush1.msra.mxu0 0.0
    %1595 = vmatprep.subr.mxu0 0.0
    %1596 = vmatpush1.msra.mxu0 0.0
    %1597 = vmatprep.subr.mxu0 0.0
    %1598 = vmatpush1.msra.mxu0 0.0
    %1599 = vmatprep.subr.mxu0 0.0
    %1600 = vmatpush1.msra.mxu0 0.0
    %1601 = vmatprep.subr.mxu0 0.0
    %1602 = vmatpush1.msra.mxu0 0.0
    %1603 = vmatprep.subr.mxu0 0.0
    %1604 = vmatpush1.msra.mxu0 0.0
    %1605 = vmatprep.subr.mxu0 0.0
    %1606 = vmatpush1.msra.mxu0 0.0
    %1607 = vmatprep.subr.mxu0 0.0
    %1608 = vmatpush1.msra.mxu0 0.0
    %1609 = vmatprep.subr.mxu0 0.0
    %1610 = vmatpush1.msra.mxu0 0.0
    %1611 = vmatprep.mubr.f32.mxu0 0.0
    %1612 = vmatmul.mubr.f32.gmra.mrb[0].mxu0 %v1394
    %v1613 = vpop.f32.mrb[0].mxu0
    %v1614 = vadd.f32 0.0, %v1613
    %v1615 = vpop.f32.mrb[0].mxu0
    %1616 = vdwg.mxu0
    %v1617 = vadd.f32 %v1546, %v1614
    %v1618 = vmax.f32 %v1617, 0.0
    %s1619 = scalar_lea.vmem [#allocation9], 48
    %1620 = vst [vmem:[%s1619] sm:$0xff] %v1618
    %1621 = vmatprep.subr.mxu0 0.0
    %1622 = vmatpush1.msra.mxu0 %v96
    %1623 = vmatprep.subr.mxu0 0.0
    %1624 = vmatpush1.msra.mxu0 %v97
    %1625 = vmatprep.subr.mxu0 0.0
    %1626 = vmatpush1.msra.mxu0 %v98
    %1627 = vmatprep.subr.mxu0 0.0
    %1628 = vmatpush1.msra.mxu0 %v99
    %1629 = vmatprep.subr.mxu0 0.0
    %1630 = vmatpush1.msra.mxu0 %v100
    %1631 = vmatprep.subr.mxu0 0.0
    %1632 = vmatpush1.msra.mxu0 %v101
    %1633 = vmatprep.subr.mxu0 0.0
    %1634 = vmatpush1.msra.mxu0 %v102
    %1635 = vmatprep.subr.mxu0 0.0
    %1636 = vmatpush1.msra.mxu0 %v103
    %1637 = vmatprep.subr.mxu0 0.0
    %1638 = vmatpush1.msra.mxu0 %v104
    %1639 = vmatprep.subr.mxu0 0.0
    %1640 = vmatpush1.msra.mxu0 %v105
    %1641 = vmatprep.subr.mxu0 0.0
    %1642 = vmatpush1.msra.mxu0 %v106
    %1643 = vmatprep.subr.mxu0 0.0
    %1644 = vmatpush1.msra.mxu0 %v107
    %1645 = vmatprep.subr.mxu0 0.0
    %1646 = vmatpush1.msra.mxu0 %v108
    %1647 = vmatprep.subr.mxu0 0.0
    %1648 = vmatpush1.msra.mxu0 %v109
    %1649 = vmatprep.subr.mxu0 0.0
    %1650 = vmatpush1.msra.mxu0 %v110
    %1651 = vmatprep.subr.mxu0 0.0
    %1652 = vmatpush1.msra.mxu0 %v111
    %1653 = vmatprep.subr.mxu0 0.0
    %1654 = vmatpush1.msra.mxu0 0.0
    %1655 = vmatprep.subr.mxu0 0.0
    %1656 = vmatpush1.msra.mxu0 0.0
    %1657 = vmatprep.subr.mxu0 0.0
    %1658 = vmatpush1.msra.mxu0 0.0
    %1659 = vmatprep.subr.mxu0 0.0
    %1660 = vmatpush1.msra.mxu0 0.0
    %1661 = vmatprep.subr.mxu0 0.0
    %1662 = vmatpush1.msra.mxu0 0.0
    %1663 = vmatprep.subr.mxu0 0.0
    %1664 = vmatpush1.msra.mxu0 0.0
    %1665 = vmatprep.subr.mxu0 0.0
    %1666 = vmatpush1.msra.mxu0 0.0
    %1667 = vmatprep.subr.mxu0 0.0
    %1668 = vmatpush1.msra.mxu0 0.0
    %1669 = vmatprep.subr.mxu0 0.0
    %1670 = vmatpush1.msra.mxu0 0.0
    %1671 = vmatprep.subr.mxu0 0.0
    %1672 = vmatpush1.msra.mxu0 0.0
    %1673 = vmatprep.subr.mxu0 0.0
    %1674 = vmatpush1.msra.mxu0 0.0
    %1675 = vmatprep.subr.mxu0 0.0
    %1676 = vmatpush1.msra.mxu0 0.0
    %1677 = vmatprep.subr.mxu0 0.0
    %1678 = vmatpush1.msra.mxu0 0.0
    %1679 = vmatprep.subr.mxu0 0.0
    %1680 = vmatpush1.msra.mxu0 0.0
    %1681 = vmatprep.subr.mxu0 0.0
    %1682 = vmatpush1.msra.mxu0 0.0
    %1683 = vmatprep.subr.mxu0 0.0
    %1684 = vmatpush1.msra.mxu0 0.0
    %1685 = vmatprep.mubr.f32.mxu0 0.0
    %1686 = vmatmul.mubr.f32.gmra.mrb[0].mxu0 %v1618
    %v1687 = vpop.f32.mrb[0].mxu0
    %v1688 = vadd.f32 %v275, %v1687
    %v1689 = vpop.f32.mrb[0].mxu0
    %1690 = vdwg.mxu0
    %s1691 = scalar_lea.vmem [#allocation10], 48
    %1692 = vst.msk [vmem:[%s1691] sm:$0xff] %vm347, %v1688
    %s1693 = scalar_lea.vmem [#allocation3], 56
    %v1694 = vld [vmem:[%s1693] sm:$0xff]
    %v1696 = vsel %vm122, %v1694, 0
    %1698 = vmatprep.subr.mxu0 0.0
    %1699 = vmatpush1.msra.mxu0 %v78
    %1700 = vmatprep.subr.mxu0 0.0
    %1701 = vmatpush1.msra.mxu0 %v79
    %1702 = vmatprep.subr.mxu0 0.0
    %1703 = vmatpush1.msra.mxu0 0.0
    %1704 = vmatprep.subr.mxu0 0.0
    %1705 = vmatpush1.msra.mxu0 0.0
    %1706 = vmatprep.subr.mxu0 0.0
    %1707 = vmatpush1.msra.mxu0 0.0
    %1708 = vmatprep.subr.mxu0 0.0
    %1709 = vmatpush1.msra.mxu0 0.0
    %1710 = vmatprep.subr.mxu0 0.0
    %1711 = vmatpush1.msra.mxu0 0.0
    %1712 = vmatprep.subr.mxu0 0.0
    %1713 = vmatpush1.msra.mxu0 0.0
    %1714 = vmatprep.subr.mxu0 0.0
    %1715 = vmatpush1.msra.mxu0 0.0
    %1716 = vmatprep.subr.mxu0 0.0
    %1717 = vmatpush1.msra.mxu0 0.0
    %1718 = vmatprep.subr.mxu0 0.0
    %1719 = vmatpush1.msra.mxu0 0.0
    %1720 = vmatprep.subr.mxu0 0.0
    %1721 = vmatpush1.msra.mxu0 0.0
    %1722 = vmatprep.subr.mxu0 0.0
    %1723 = vmatpush1.msra.mxu0 0.0
    %1724 = vmatprep.subr.mxu0 0.0
    %1725 = vmatpush1.msra.mxu0 0.0
    %1726 = vmatprep.subr.mxu0 0.0
    %1727 = vmatpush1.msra.mxu0 0.0
    %1728 = vmatprep.subr.mxu0 0.0
    %1729 = vmatpush1.msra.mxu0 0.0
    %1730 = vmatprep.subr.mxu0 0.0
    %1731 = vmatpush1.msra.mxu0 0.0
    %1732 = vmatprep.subr.mxu0 0.0
    %1733 = vmatpush1.msra.mxu0 0.0
    %1734 = vmatprep.subr.mxu0 0.0
    %1735 = vmatpush1.msra.mxu0 0.0
    %1736 = vmatprep.subr.mxu0 0.0
    %1737 = vmatpush1.msra.mxu0 0.0
    %1738 = vmatprep.subr.mxu0 0.0
    %1739 = vmatpush1.msra.mxu0 0.0
    %1740 = vmatprep.subr.mxu0 0.0
    %1741 = vmatpush1.msra.mxu0 0.0
    %1742 = vmatprep.subr.mxu0 0.0
    %1743 = vmatpush1.msra.mxu0 0.0
    %1744 = vmatprep.subr.mxu0 0.0
    %1745 = vmatpush1.msra.mxu0 0.0
    %1746 = vmatprep.subr.mxu0 0.0
    %1747 = vmatpush1.msra.mxu0 0.0
    %1748 = vmatprep.subr.mxu0 0.0
    %1749 = vmatpush1.msra.mxu0 0.0
    %1750 = vmatprep.subr.mxu0 0.0
    %1751 = vmatpush1.msra.mxu0 0.0
    %1752 = vmatprep.subr.mxu0 0.0
    %1753 = vmatpush1.msra.mxu0 0.0
    %1754 = vmatprep.subr.mxu0 0.0
    %1755 = vmatpush1.msra.mxu0 0.0
    %1756 = vmatprep.subr.mxu0 0.0
    %1757 = vmatpush1.msra.mxu0 0.0
    %1758 = vmatprep.subr.mxu0 0.0
    %1759 = vmatpush1.msra.mxu0 0.0
    %1760 = vmatprep.subr.mxu0 0.0
    %1761 = vmatpush1.msra.mxu0 0.0
    %1762 = vmatprep.mubr.f32.mxu0 0.0
    %1763 = vmatmul.mubr.f32.gmra.mrb[0].mxu0 %v1696
    %v1764 = vpop.f32.mrb[0].mxu0
    %v1765 = vadd.f32 %v120, %v1764
    %v1766 = vpop.f32.mrb[0].mxu0
    %1767 = vdwg.mxu0
    %s1768 = scalar_lea.vmem [#allocation6], 56
    %v1769 = vld [vmem:[%s1768] sm:$0xff]
    %v1770 = vadd.f32 %v1765, %v1769
    %1771 = vmatprep.subr.mxu0 0.0
    %1772 = vmatpush1.msra.mxu0 %v80
    %1773 = vmatprep.subr.mxu0 0.0
    %1774 = vmatpush1.msra.mxu0 %v81
    %1775 = vmatprep.subr.mxu0 0.0
    %1776 = vmatpush1.msra.mxu0 %v82
    %1777 = vmatprep.subr.mxu0 0.0
    %1778 = vmatpush1.msra.mxu0 %v83
    %1779 = vmatprep.subr.mxu0 0.0
    %1780 = vmatpush1.msra.mxu0 %v84
    %1781 = vmatprep.subr.mxu0 0.0
    %1782 = vmatpush1.msra.mxu0 %v85
    %1783 = vmatprep.subr.mxu0 0.0
    %1784 = vmatpush1.msra.mxu0 %v86
    %1785 = vmatprep.subr.mxu0 0.0
    %1786 = vmatpush1.msra.mxu0 %v87
    %1787 = vmatprep.subr.mxu0 0.0
    %1788 = vmatpush1.msra.mxu0 %v88
    %1789 = vmatprep.subr.mxu0 0.0
    %1790 = vmatpush1.msra.mxu0 %v89
    %1791 = vmatprep.subr.mxu0 0.0
    %1792 = vmatpush1.msra.mxu0 %v90
    %1793 = vmatprep.subr.mxu0 0.0
    %1794 = vmatpush1.msra.mxu0 %v91
    %1795 = vmatprep.subr.mxu0 0.0
    %1796 = vmatpush1.msra.mxu0 %v92
    %1797 = vmatprep.subr.mxu0 0.0
    %1798 = vmatpush1.msra.mxu0 %v93
    %1799 = vmatprep.subr.mxu0 0.0
    %1800 = vmatpush1.msra.mxu0 %v94
    %1801 = vmatprep.subr.mxu0 0.0
    %1802 = vmatpush1.msra.mxu0 %v95
    %1803 = vmatprep.subr.mxu0 0.0
    %1804 = vmatpush1.msra.mxu0 0.0
    %1805 = vmatprep.subr.mxu0 0.0
    %1806 = vmatpush1.msra.mxu0 0.0
    %1807 = vmatprep.subr.mxu0 0.0
    %1808 = vmatpush1.msra.mxu0 0.0
    %1809 = vmatprep.subr.mxu0 0.0
    %1810 = vmatpush1.msra.mxu0 0.0
    %1811 = vmatprep.subr.mxu0 0.0
    %1812 = vmatpush1.msra.mxu0 0.0
    %1813 = vmatprep.subr.mxu0 0.0
    %1814 = vmatpush1.msra.mxu0 0.0
    %1815 = vmatprep.subr.mxu0 0.0
    %1816 = vmatpush1.msra.mxu0 0.0
    %1817 = vmatprep.subr.mxu0 0.0
    %1818 = vmatpush1.msra.mxu0 0.0
    %1819 = vmatprep.subr.mxu0 0.0
    %1820 = vmatpush1.msra.mxu0 0.0
    %1821 = vmatprep.subr.mxu0 0.0
    %1822 = vmatpush1.msra.mxu0 0.0
    %1823 = vmatprep.subr.mxu0 0.0
    %1824 = vmatpush1.msra.mxu0 0.0
    %1825 = vmatprep.subr.mxu0 0.0
    %1826 = vmatpush1.msra.mxu0 0.0
    %1827 = vmatprep.subr.mxu0 0.0
    %1828 = vmatpush1.msra.mxu0 0.0
    %1829 = vmatprep.subr.mxu0 0.0
    %1830 = vmatpush1.msra.mxu0 0.0
    %1831 = vmatprep.subr.mxu0 0.0
    %1832 = vmatpush1.msra.mxu0 0.0
    %1833 = vmatprep.subr.mxu0 0.0
    %1834 = vmatpush1.msra.mxu0 0.0
    %1835 = vmatprep.mubr.f32.mxu0 0.0
    %1836 = vmatmul.mubr.f32.gmra.mrb[0].mxu0 %v1618
    %v1837 = vpop.f32.mrb[0].mxu0
    %v1838 = vadd.f32 0.0, %v1837
    %v1839 = vpop.f32.mrb[0].mxu0
    %1840 = vdwg.mxu0
    %v1841 = vadd.f32 %v1770, %v1838
    %v1842 = vmax.f32 %v1841, 0.0
    %s1843 = scalar_lea.vmem [#allocation9], 56
    %1844 = vst [vmem:[%s1843] sm:$0xff] %v1842
    %1845 = vmatprep.subr.mxu0 0.0
    %1846 = vmatpush1.msra.mxu0 %v96
    %1847 = vmatprep.subr.mxu0 0.0
    %1848 = vmatpush1.msra.mxu0 %v97
    %1849 = vmatprep.subr.mxu0 0.0
    %1850 = vmatpush1.msra.mxu0 %v98
    %1851 = vmatprep.subr.mxu0 0.0
    %1852 = vmatpush1.msra.mxu0 %v99
    %1853 = vmatprep.subr.mxu0 0.0
    %1854 = vmatpush1.msra.mxu0 %v100
    %1855 = vmatprep.subr.mxu0 0.0
    %1856 = vmatpush1.msra.mxu0 %v101
    %1857 = vmatprep.subr.mxu0 0.0
    %1858 = vmatpush1.msra.mxu0 %v102
    %1859 = vmatprep.subr.mxu0 0.0
    %1860 = vmatpush1.msra.mxu0 %v103
    %1861 = vmatprep.subr.mxu0 0.0
    %1862 = vmatpush1.msra.mxu0 %v104
    %1863 = vmatprep.subr.mxu0 0.0
    %1864 = vmatpush1.msra.mxu0 %v105
    %1865 = vmatprep.subr.mxu0 0.0
    %1866 = vmatpush1.msra.mxu0 %v106
    %1867 = vmatprep.subr.mxu0 0.0
    %1868 = vmatpush1.msra.mxu0 %v107
    %1869 = vmatprep.subr.mxu0 0.0
    %1870 = vmatpush1.msra.mxu0 %v108
    %1871 = vmatprep.subr.mxu0 0.0
    %1872 = vmatpush1.msra.mxu0 %v109
    %1873 = vmatprep.subr.mxu0 0.0
    %1874 = vmatpush1.msra.mxu0 %v110
    %1875 = vmatprep.subr.mxu0 0.0
    %1876 = vmatpush1.msra.mxu0 %v111
    %1877 = vmatprep.subr.mxu0 0.0
    %1878 = vmatpush1.msra.mxu0 0.0
    %1879 = vmatprep.subr.mxu0 0.0
    %1880 = vmatpush1.msra.mxu0 0.0
    %1881 = vmatprep.subr.mxu0 0.0
    %1882 = vmatpush1.msra.mxu0 0.0
    %1883 = vmatprep.subr.mxu0 0.0
    %1884 = vmatpush1.msra.mxu0 0.0
    %1885 = vmatprep.subr.mxu0 0.0
    %1886 = vmatpush1.msra.mxu0 0.0
    %1887 = vmatprep.subr.mxu0 0.0
    %1888 = vmatpush1.msra.mxu0 0.0
    %1889 = vmatprep.subr.mxu0 0.0
    %1890 = vmatpush1.msra.mxu0 0.0
    %1891 = vmatprep.subr.mxu0 0.0
    %1892 = vmatpush1.msra.mxu0 0.0
    %1893 = vmatprep.subr.mxu0 0.0
    %1894 = vmatpush1.msra.mxu0 0.0
    %1895 = vmatprep.subr.mxu0 0.0
    %1896 = vmatpush1.msra.mxu0 0.0
    %1897 = vmatprep.subr.mxu0 0.0
    %1898 = vmatpush1.msra.mxu0 0.0
    %1899 = vmatprep.subr.mxu0 0.0
    %1900 = vmatpush1.msra.mxu0 0.0
    %1901 = vmatprep.subr.mxu0 0.0
    %1902 = vmatpush1.msra.mxu0 0.0
    %1903 = vmatprep.subr.mxu0 0.0
    %1904 = vmatpush1.msra.mxu0 0.0
    %1905 = vmatprep.subr.mxu0 0.0
    %1906 = vmatpush1.msra.mxu0 0.0
    %1907 = vmatprep.subr.mxu0 0.0
    %1908 = vmatpush1.msra.mxu0 0.0
    %1909 = vmatprep.mubr.f32.mxu0 0.0
    %1910 = vmatmul.mubr.f32.gmra.mrb[0].mxu0 %v1842
    %v1911 = vpop.f32.mrb[0].mxu0
    %v1912 = vadd.f32 %v275, %v1911
    %v1913 = vpop.f32.mrb[0].mxu0
    %1914 = vdwg.mxu0
    %s1915 = scalar_lea.vmem [#allocation10], 56
    %1916 = vst.msk [vmem:[%s1915] sm:$0xff] %vm347, %v1912
    %1917 = vst [vmem:[#allocation2] sm:$0xff] %v1842
    // Predicated region
    $region50: #{tpu_custom_call.1} parent=1 // pred_check
      _
    $region51: #{tpu_custom_call.1} parent=1 // pred_check_branch
      %1919 = sbr.rel (0) target = $region53
    $region52: #{tpu_custom_call.1} parent=1 // pred_region
      %s1921 = ssub.s32 1024, 1024
      %1922 = vsyncadd [#allocation5], %s1921
      %s1923 = sshll.u32 [#allocation9], 4
      %s1924 = int_to_ptr.vmem [resolvable:$true] %s1923
      %1929 = dma.vmem_to_hbm [thread:$0]  %s1924, 1024, %s8, [#allocation5], 128, 128, 8
    $region53: #{tpu_custom_call.1} parent=1 // pred_fallthru
      _
    // Predicated region
    $region54: #{tpu_custom_call.1} parent=1 // pred_check
      _
    $region55: #{tpu_custom_call.1} parent=1 // pred_check_branch
      %1931 = sbr.rel (0) target = $region57
    $region56: #{tpu_custom_call.1} parent=1 // pred_region
      %s1933 = ssub.s32 1024, 1024
      %1934 = vsyncadd [#allocation11], %s1933
      %s1935 = sshll.u32 [#allocation10], 4
      %s1936 = int_to_ptr.vmem [resolvable:$true] %s1935
      %1941 = dma.vmem_to_hbm [thread:$0]  %s1936, 1024, %s9, [#allocation11], 128, 128, 8
    $region57: #{tpu_custom_call.1} parent=1 // pred_fallthru
      _
    // Predicated region
    $region58: #{tpu_custom_call.1} parent=1 // pred_check
      _
    $region59: #{tpu_custom_call.1} parent=1 // pred_check_branch
      %1943 = sbr.rel (0) target = $region61
    $region60: #{tpu_custom_call.1} parent=1 // pred_region
      %1944 = dma.done [#allocation5], 1024
    $region61: #{tpu_custom_call.1} parent=1 // pred_fallthru
      _
    // Predicated region
    $region62: #{tpu_custom_call.1} parent=1 // pred_check
      _
    $region63: #{tpu_custom_call.1} parent=1 // pred_check_branch
      %1946 = sbr.rel (0) target = $region65
    $region64: #{tpu_custom_call.1} parent=1 // pred_region
      %1947 = dma.done [#allocation11], 1024
    $region65: #{tpu_custom_call.1} parent=1 // pred_fallthru
      _
    %1948 = vsyncpa [#allocation4], 1
    %1949 = vsyncpa [#allocation7], 1
    %1950 = vsyncpa [#allocation5], 1
    %1951 = vsyncpa [#allocation11], 1

</llo_original>
